<compile_context>
chip_gen: v7x
topology: tpu7x:2x2x1
jax: 0.10.0
libtpu: 0.0.40
codegen_flags: <defaults>
</compile_context>

<pallas_src>
import jax
import jax.numpy as jnp
from jax.experimental import pallas as pl
from jax.experimental.pallas import tpu as pltpu

NUM_CLASSES = 3
PAD_CLASSES = 128   # lane-padded class dim used for the FC2 matmul
FC1_DIM = 512


def _round_up(x, m):
    return (x + m - 1) // m * m


def _snli_kernel(p_ref, h_ref, we_ref, be_ref, w1_ref, b1_ref, w2_ref, b2_ref,
                 out_ref):
    """One batch tile of the full forward pass.

    p_ref, h_ref: [TB, S*D]      f32   premise / hypothesis slabs
    we_ref      : [S*D, Hp]      bf16  encoder weight (mean-pool folded in)
    be_ref      : [1, Hp]        f32
    w1_ref      : [4*Hp, 512]    bf16  FC1 weight, blocks for u / v / |u-v| / u*v
    b1_ref      : [1, 512]       f32
    w2_ref      : [512, 128]     bf16  class dim zero-padded to 128 lanes
    b2_ref      : [1, 128]       f32
    out_ref     : [TB, 3]        f32   softmax probs
    """
    bf = jnp.bfloat16

    # ---- encoder: pooling + projection as one lane-dense matmul per input ---
    u = jnp.dot(p_ref[...].astype(bf), we_ref[...],
                preferred_element_type=jnp.float32) + be_ref[...]
    v = jnp.dot(h_ref[...].astype(bf), we_ref[...],
                preferred_element_type=jnp.float32) + be_ref[...]
    u = jnp.maximum(u, 0.0)                                        # [TB, Hp]
    v = jnp.maximum(v, 0.0)                                        # [TB, Hp]

    # ---- interaction features; Hp is a multiple of 128 so the lane concat is
    # pure vreg placement and the FC1 contraction (K = 4*Hp) is one matmul.
    feats = jnp.concatenate([u, v, jnp.abs(u - v), u * v], axis=-1)  # [TB, 4Hp]
    h1 = jnp.dot(feats.astype(bf), w1_ref[...],
                 preferred_element_type=jnp.float32) + b1_ref[...]
    h1 = jnp.maximum(h1, 0.0)                                        # [TB, 512]
    # nn.Dropout: identity at inference time.

    # ---- FC2 + masked softmax over the lane-padded class dim ---------------
    logits = jnp.dot(h1.astype(bf), w2_ref[...],
                     preferred_element_type=jnp.float32) + b2_ref[...]  # [TB,128]
    col = jax.lax.broadcasted_iota(jnp.int32, logits.shape, 1)
    logits = jnp.where(col < NUM_CLASSES, logits, jnp.float32(-1e30))
    m = jnp.max(logits, axis=-1, keepdims=True)
    e = jnp.exp(logits - m)
    s = jnp.sum(e, axis=-1, keepdims=True)
    probs = e / s                       # exact normalization (matches Softmax)

    out_ref[...] = probs[:, :NUM_CLASSES]


def _pick_tiles(B, SD):
    """Pick batch-tile rows per grid step and the padded batch size."""
    # VMEM budget for the two double-buffered f32 activation slabs:
    #   2 inputs * 2 buffers * TB * SD * 4 B  <= ~8 MiB
    # (safe against v7x's 64 MiB physical VMEM and default scoped limits).
    budget_bytes = 8 * 1024 * 1024
    cap = budget_bytes // (2 * 2 * SD * 4)
    cap = max(8, min(512, (cap // 8) * 8))
    if B <= 16 and B <= cap:
        return B, B                                   # one tile, no padding
    # >= 2 grid steps so v7x's two TensorCores both get work.
    tb = min(cap, _round_up((B + 1) // 2, 8))
    return tb, _round_up(B, tb)


@jax.jit
def snli_forward(premise, hypothesis, params):
    """premise, hypothesis: [B, S, D] float32. Returns [B, 3] softmax probs."""
    B, S, D = premise.shape
    SD = S * D
    Hp = params["b_enc"].shape[-1]                    # lane-padded layer_size

    # [B, S, D] -> [B, S*D]: contiguous reshape, no data movement.
    p2 = premise.reshape(B, SD)
    h2 = hypothesis.reshape(B, SD)

    TB, B_pad = _pick_tiles(B, SD)
    nb = B_pad // TB
    if B_pad != B:
        p2 = jnp.pad(p2, ((0, B_pad - B), (0, 0)))
        h2 = jnp.pad(h2, ((0, B_pad - B), (0, 0)))

    flops = 2 * B_pad * (2 * SD * Hp + 4 * Hp * FC1_DIM + FC1_DIM * PAD_CLASSES)
    bytes_accessed = (2 * B_pad * SD * 4
                      + (SD * Hp + 4 * Hp * FC1_DIM + FC1_DIM * PAD_CLASSES) * 2
                      + (Hp + FC1_DIM + PAD_CLASSES) * 4
                      + B_pad * NUM_CLASSES * 4)

    out_pad = pl.pallas_call(
        _snli_kernel,
        out_shape=jax.ShapeDtypeStruct((B_pad, NUM_CLASSES), jnp.float32),
        grid=(nb,),
        in_specs=[
            pl.BlockSpec((TB, SD), lambda i: (i, 0)),                # premise
            pl.BlockSpec((TB, SD), lambda i: (i, 0)),                # hypothesis
            pl.BlockSpec((SD, Hp), lambda i: (0, 0)),                # w_enc_fused
            pl.BlockSpec((1, Hp), lambda i: (0, 0)),                 # b_enc
            pl.BlockSpec((4 * Hp, FC1_DIM), lambda i: (0, 0)),       # w1_cat
            pl.BlockSpec((1, FC1_DIM), lambda i: (0, 0)),            # b1
            pl.BlockSpec((FC1_DIM, PAD_CLASSES), lambda i: (0, 0)),  # w2_pad
            pl.BlockSpec((1, PAD_CLASSES), lambda i: (0, 0)),        # b2_pad
        ],
        out_specs=pl.BlockSpec((TB, NUM_CLASSES), lambda i: (i, 0)),
        compiler_params=pltpu.CompilerParams(
            dimension_semantics=("parallel",),
            vmem_limit_bytes=32 * 1024 * 1024),
        cost_estimate=pl.CostEstimate(
            flops=flops,
            transcendentals=B_pad * PAD_CLASSES,
            bytes_accessed=bytes_accessed),
    )(p2, h2, params["w_enc_fused"], params["b_enc"],
      params["w1_cat"], params["b1"], params["w2_pad"], params["b2_pad"])

    return out_pad[:B]


def init_params(key, embed_dim, layer_size, seq_len):
    """Deterministic synthetic parameters, pre-transformed for the kernel."""
    ks = jax.random.split(key, 6)
    D, H, S = embed_dim, layer_size, seq_len
    Hp = _round_up(H, 128)

    def lin(k, fan_in, shape):
        return jax.random.normal(k, shape, jnp.float32) / jnp.sqrt(fan_in)

    w_enc = lin(ks[0], D, (D, H))
    b_enc = lin(ks[1], D, (1, H))
    w1 = lin(ks[2], 4 * H, (4 * H, FC1_DIM))
    b1 = lin(ks[3], 4 * H, (1, FC1_DIM))
    w2 = lin(ks[4], FC1_DIM, (FC1_DIM, NUM_CLASSES))
    b2 = lin(ks[5], FC1_DIM, (1, NUM_CLASSES))

    # Fold the 1/S mean-pool into the encoder weight (tile over S) and zero-pad
    # H to a lane multiple so pooling + projection is one [*,S*D]@[S*D,Hp] matmul.
    w_enc_fused = jnp.tile(w_enc / S, (S, 1))                       # [S*D, H]
    w_enc_fused = jnp.pad(w_enc_fused, ((0, 0), (0, Hp - H))).astype(jnp.bfloat16)
    b_enc_p = jnp.pad(b_enc, ((0, 0), (0, Hp - H)))                 # [1, Hp] f32
    # Padded encoder columns are ReLU(0)=0, and the matching FC1 rows below are
    # zero, so the padding is exact.

    # FC1 weight: split into its four feature blocks (u, v, |u-v|, u*v), pad
    # each block's H rows to Hp, and re-concatenate so the lane-wise feature
    # concat in the kernel hits a single [TB, 4*Hp] @ [4*Hp, 512] matmul.
    w1_blocks = w1.reshape(4, H, FC1_DIM)
    w1_cat = jnp.concatenate(
        [jnp.pad(w1_blocks[i], ((0, Hp - H), (0, 0))) for i in range(4)],
        axis=0).astype(jnp.bfloat16)                                # [4*Hp, 512]

    # Pad the class dim to 128 lanes (zeros); padded logits are masked to -inf
    # before softmax, so the result matches the unpadded math exactly.
    w2_pad = jnp.zeros((FC1_DIM, PAD_CLASSES), jnp.float32)
    w2_pad = w2_pad.at[:, :NUM_CLASSES].set(w2).astype(jnp.bfloat16)
    b2_pad = jnp.zeros((1, PAD_CLASSES), jnp.float32).at[:, :NUM_CLASSES].set(b2)

    return {"w_enc_fused": w_enc_fused, "b_enc": b_enc_p,
            "w1_cat": w1_cat, "b1": b1,
            "w2_pad": w2_pad, "b2_pad": b2_pad}


def snli_reference(premise, hypothesis, params):
    """Pure-JAX reference mirroring the kernel math (same bf16 quantization)."""
    B, S, D = premise.shape
    bf = jnp.bfloat16

    def encode(x):
        xf = x.reshape(B, S * D).astype(bf)
        h = jnp.dot(xf, params["w_enc_fused"],
                    preferred_element_type=jnp.float32) + params["b_enc"]
        return jnp.maximum(h, 0.0)

    u = encode(premise)
    v = encode(hypothesis)
    feats = jnp.concatenate([u, v, jnp.abs(u - v), u * v], axis=-1).astype(bf)
    h1 = jnp.maximum(
        jnp.dot(feats, params["w1_cat"], preferred_element_type=jnp.float32)
        + params["b1"], 0.0)
    logits = (jnp.dot(h1.astype(bf), params["w2_pad"],
                      preferred_element_type=jnp.float32) + params["b2_pad"])
    return jax.nn.softmax(logits[:, :NUM_CLASSES], axis=-1)


if __name__ == "__main__":
    B, S, D, H = 2, 8, 32, 64   # batch, seq, embed_dim, encoder.layer_size

    key = jax.random.PRNGKey(0)
    k_prem, k_hyp, k_params = jax.random.split(key, 3)

    premise = jax.random.normal(k_prem, (B, S, D), jnp.float32)
    hypothesis = jax.random.normal(k_hyp, (B, S, D), jnp.float32)
    params = init_params(k_params, D, H, S)

    out = snli_forward(premise, hypothesis, params)
    out = jax.block_until_ready(out)

    ref = snli_reference(premise, hypothesis, params)
    assert out.shape == (B, NUM_CLASSES), out.shape
    # bf16 MXU operands in both paths; softmax is exact in both.
    assert jnp.allclose(out, ref, atol=2e-3, rtol=2e-3), (out, ref)
    assert jnp.allclose(jnp.sum(out, axis=-1), 1.0, atol=1e-3)

    print("KERNEL_OK")
</pallas_src>

<mosaic_0001>
module attributes {stable_mosaic.version = 11 : i64} {
  func.func @_snli_kernel(%arg0: i32, %arg1: memref<2x256xf32, #tpu.memory_space<vmem>>, %arg2: memref<2x256xf32, #tpu.memory_space<vmem>>, %arg3: memref<256x128xbf16, #tpu.memory_space<vmem>>, %arg4: memref<1x128xf32, #tpu.memory_space<vmem>>, %arg5: memref<512x512xbf16, #tpu.memory_space<vmem>>, %arg6: memref<1x512xf32, #tpu.memory_space<vmem>>, %arg7: memref<512x128xbf16, #tpu.memory_space<vmem>>, %arg8: memref<1x128xf32, #tpu.memory_space<vmem>>, %arg9: memref<2x3xf32, #tpu.memory_space<vmem>>) attributes {dimension_semantics = [#tpu.dimension_semantics<parallel>], iteration_bounds = array<i64: 1>, scalar_prefetch = 0 : i64, scratch_operands = 0 : i64, tpu.core_type = #tpu.core_type<tc>, window_params = [{transform_indices = @transform_0, window_bounds = array<i64: 2, 256>}, {transform_indices = @transform_1, window_bounds = array<i64: 2, 256>}, {pipeline_mode = #tpu.pipeline_mode<synchronous>, transform_indices = @transform_2, window_bounds = array<i64: 256, 128>}, {pipeline_mode = #tpu.pipeline_mode<synchronous>, transform_indices = @transform_3, window_bounds = array<i64: 1, 128>}, {pipeline_mode = #tpu.pipeline_mode<synchronous>, transform_indices = @transform_4, window_bounds = array<i64: 512, 512>}, {pipeline_mode = #tpu.pipeline_mode<synchronous>, transform_indices = @transform_5, window_bounds = array<i64: 1, 512>}, {pipeline_mode = #tpu.pipeline_mode<synchronous>, transform_indices = @transform_6, window_bounds = array<i64: 512, 128>}, {pipeline_mode = #tpu.pipeline_mode<synchronous>, transform_indices = @transform_7, window_bounds = array<i64: 1, 128>}, {transform_indices = @transform_8, window_bounds = array<i64: 2, 3>}]} {
    %c0 = arith.constant 0 : index
    %c0_0 = arith.constant 0 : index
    %0 = vector.load %arg1[%c0, %c0_0] : memref<2x256xf32, #tpu.memory_space<vmem>>, vector<2x256xf32>
    %1 = arith.truncf %0 : vector<2x256xf32> to vector<2x256xbf16>
    %c0_1 = arith.constant 0 : index
    %c0_2 = arith.constant 0 : index
    %2 = vector.load %arg3[%c0_1, %c0_2] : memref<256x128xbf16, #tpu.memory_space<vmem>>, vector<256x128xbf16>
    %cst = arith.constant dense<0.000000e+00> : vector<2x128xf32>
    %3 = tpu.matmul %1, %2, %cst {dimension_numbers = #tpu.dot_dimension_numbers<[1], [0], [0], [1], [0, 0, 1, 1], [], []>} : vector<2x256xbf16>, vector<256x128xbf16>, vector<2x128xf32> -> vector<2x128xf32>
    %c0_3 = arith.constant 0 : index
    %c0_4 = arith.constant 0 : index
    %4 = vector.load %arg4[%c0_3, %c0_4] : memref<1x128xf32, #tpu.memory_space<vmem>>, vector<1x128xf32>
    %5 = vector.broadcast %4 : vector<1x128xf32> to vector<2x128xf32>
    %6 = arith.addf %3, %5 : vector<2x128xf32>
    %c0_5 = arith.constant 0 : index
    %c0_6 = arith.constant 0 : index
    %7 = vector.load %arg2[%c0_5, %c0_6] : memref<2x256xf32, #tpu.memory_space<vmem>>, vector<2x256xf32>
    %8 = arith.truncf %7 : vector<2x256xf32> to vector<2x256xbf16>
    %c0_7 = arith.constant 0 : index
    %c0_8 = arith.constant 0 : index
    %9 = vector.load %arg3[%c0_7, %c0_8] : memref<256x128xbf16, #tpu.memory_space<vmem>>, vector<256x128xbf16>
    %cst_9 = arith.constant dense<0.000000e+00> : vector<2x128xf32>
    %10 = tpu.matmul %8, %9, %cst_9 {dimension_numbers = #tpu.dot_dimension_numbers<[1], [0], [0], [1], [0, 0, 1, 1], [], []>} : vector<2x256xbf16>, vector<256x128xbf16>, vector<2x128xf32> -> vector<2x128xf32>
    %c0_10 = arith.constant 0 : index
    %c0_11 = arith.constant 0 : index
    %11 = vector.load %arg4[%c0_10, %c0_11] : memref<1x128xf32, #tpu.memory_space<vmem>>, vector<1x128xf32>
    %12 = vector.broadcast %11 : vector<1x128xf32> to vector<2x128xf32>
    %13 = arith.addf %10, %12 : vector<2x128xf32>
    %cst_12 = arith.constant 0.000000e+00 : f32
    %14 = vector.broadcast %cst_12 : f32 to vector<2x128xf32>
    %15 = arith.maximumf %6, %14 : vector<2x128xf32>
    %cst_13 = arith.constant 0.000000e+00 : f32
    %16 = vector.broadcast %cst_13 : f32 to vector<2x128xf32>
    %17 = arith.maximumf %13, %16 : vector<2x128xf32>
    %18 = arith.subf %15, %17 : vector<2x128xf32>
    %19 = math.absf %18 : vector<2x128xf32>
    %20 = arith.mulf %15, %17 : vector<2x128xf32>
    %21 = tpu.concatenate %15, %17, %19, %20 in 1 : vector<2x128xf32>, vector<2x128xf32>, vector<2x128xf32>, vector<2x128xf32> -> vector<2x512xf32>
    %22 = arith.truncf %21 : vector<2x512xf32> to vector<2x512xbf16>
    %c0_14 = arith.constant 0 : index
    %c0_15 = arith.constant 0 : index
    %23 = vector.load %arg5[%c0_14, %c0_15] : memref<512x512xbf16, #tpu.memory_space<vmem>>, vector<512x512xbf16>
    %cst_16 = arith.constant dense<0.000000e+00> : vector<2x512xf32>
    %24 = tpu.matmul %22, %23, %cst_16 {dimension_numbers = #tpu.dot_dimension_numbers<[1], [0], [0], [1], [0, 0, 1, 1], [], []>} : vector<2x512xbf16>, vector<512x512xbf16>, vector<2x512xf32> -> vector<2x512xf32>
    %c0_17 = arith.constant 0 : index
    %c0_18 = arith.constant 0 : index
    %25 = vector.load %arg6[%c0_17, %c0_18] : memref<1x512xf32, #tpu.memory_space<vmem>>, vector<1x512xf32>
    %26 = vector.broadcast %25 : vector<1x512xf32> to vector<2x512xf32>
    %27 = arith.addf %24, %26 : vector<2x512xf32>
    %cst_19 = arith.constant 0.000000e+00 : f32
    %28 = vector.broadcast %cst_19 : f32 to vector<2x512xf32>
    %29 = arith.maximumf %27, %28 : vector<2x512xf32>
    %30 = arith.truncf %29 : vector<2x512xf32> to vector<2x512xbf16>
    %c0_20 = arith.constant 0 : index
    %c0_21 = arith.constant 0 : index
    %31 = vector.load %arg7[%c0_20, %c0_21] : memref<512x128xbf16, #tpu.memory_space<vmem>>, vector<512x128xbf16>
    %cst_22 = arith.constant dense<0.000000e+00> : vector<2x128xf32>
    %32 = tpu.matmul %30, %31, %cst_22 {dimension_numbers = #tpu.dot_dimension_numbers<[1], [0], [0], [1], [0, 0, 1, 1], [], []>} : vector<2x512xbf16>, vector<512x128xbf16>, vector<2x128xf32> -> vector<2x128xf32>
    %c0_23 = arith.constant 0 : index
    %c0_24 = arith.constant 0 : index
    %33 = vector.load %arg8[%c0_23, %c0_24] : memref<1x128xf32, #tpu.memory_space<vmem>>, vector<1x128xf32>
    %34 = vector.broadcast %33 : vector<1x128xf32> to vector<2x128xf32>
    %35 = arith.addf %32, %34 : vector<2x128xf32>
    %36 = tpu.iota {dimensions = array<i32: 1>} : vector<2x128xi32>
    %c3_i32 = arith.constant 3 : i32
    %37 = vector.broadcast %c3_i32 : i32 to vector<2x128xi32>
    %38 = arith.cmpi slt, %36, %37 : vector<2x128xi32>
    %cst_25 = arith.constant -1.000000e+30 : f32
    %39 = vector.broadcast %cst_25 : f32 to vector<2x128xf32>
    %40 = arith.select %38, %35, %39 : vector<2x128xi1>, vector<2x128xf32>
    %cst_26 = arith.constant dense<0xFF800000> : vector<2xf32>
    %41 = vector.multi_reduction <maximumf>, %40, %cst_26 [1] : vector<2x128xf32> to vector<2xf32>
    %42 = vector.shape_cast %41 : vector<2xf32> to vector<2x1xf32>
    %43 = vector.broadcast %42 : vector<2x1xf32> to vector<2x128xf32>
    %44 = arith.subf %40, %43 : vector<2x128xf32>
    %45 = math.exp %44 : vector<2x128xf32>
    %cst_27 = arith.constant dense<0.000000e+00> : vector<2xf32>
    %46 = vector.multi_reduction <add>, %45, %cst_27 [1] : vector<2x128xf32> to vector<2xf32>
    %47 = vector.shape_cast %46 : vector<2xf32> to vector<2x1xf32>
    %48 = vector.broadcast %47 : vector<2x1xf32> to vector<2x128xf32>
    %49 = arith.divf %45, %48 : vector<2x128xf32>
    %50 = vector.extract_strided_slice %49 {offsets = [0, 0], sizes = [2, 3], strides = [1, 1]} : vector<2x128xf32> to vector<2x3xf32>
    %c0_28 = arith.constant 0 : index
    %c0_29 = arith.constant 0 : index
    %51 = vector.load %arg9[%c0_28, %c0_29] : memref<2x3xf32, #tpu.memory_space<vmem>>, vector<2x3xf32>
    tpu.vector_store %arg9[%c0_28, %c0_29], %50 {strides = array<i32>} : memref<2x3xf32, #tpu.memory_space<vmem>>, vector<2x3xf32>,
    return
  }
  func.func @transform_0(%arg0: i32) -> (i32, i32) {
    %c0_i32 = arith.constant 0 : i32
    %c0_i32_0 = arith.constant 0 : i32
    return %arg0, %c0_i32 : i32, i32
  }
  func.func @transform_1(%arg0: i32) -> (i32, i32) {
    %c0_i32 = arith.constant 0 : i32
    %c0_i32_0 = arith.constant 0 : i32
    return %arg0, %c0_i32 : i32, i32
  }
  func.func @transform_2(%arg0: i32) -> (i32, i32) {
    %c0_i32 = arith.constant 0 : i32
    %c0_i32_0 = arith.constant 0 : i32
    %c0_i32_1 = arith.constant 0 : i32
    return %c0_i32, %c0_i32_0 : i32, i32
  }
  func.func @transform_3(%arg0: i32) -> (i32, i32) {
    %c0_i32 = arith.constant 0 : i32
    %c0_i32_0 = arith.constant 0 : i32
    %c0_i32_1 = arith.constant 0 : i32
    return %c0_i32, %c0_i32_0 : i32, i32
  }
  func.func @transform_4(%arg0: i32) -> (i32, i32) {
    %c0_i32 = arith.constant 0 : i32
    %c0_i32_0 = arith.constant 0 : i32
    %c0_i32_1 = arith.constant 0 : i32
    return %c0_i32, %c0_i32_0 : i32, i32
  }
  func.func @transform_5(%arg0: i32) -> (i32, i32) {
    %c0_i32 = arith.constant 0 : i32
    %c0_i32_0 = arith.constant 0 : i32
    %c0_i32_1 = arith.constant 0 : i32
    return %c0_i32, %c0_i32_0 : i32, i32
  }
  func.func @transform_6(%arg0: i32) -> (i32, i32) {
    %c0_i32 = arith.constant 0 : i32
    %c0_i32_0 = arith.constant 0 : i32
    %c0_i32_1 = arith.constant 0 : i32
    return %c0_i32, %c0_i32_0 : i32, i32
  }
  func.func @transform_7(%arg0: i32) -> (i32, i32) {
    %c0_i32 = arith.constant 0 : i32
    %c0_i32_0 = arith.constant 0 : i32
    %c0_i32_1 = arith.constant 0 : i32
    return %c0_i32, %c0_i32_0 : i32, i32
  }
  func.func @transform_8(%arg0: i32) -> (i32, i32) {
    %c0_i32 = arith.constant 0 : i32
    %c0_i32_0 = arith.constant 0 : i32
    return %arg0, %c0_i32 : i32, i32
  }
}

</mosaic_0001>

<llo_original>
// kernel: snli_forward.1
$region0: #{snli_forward.1}
  #allocation0 [shape = 'u32[]', space=smem, size = 0x4, offset = 0x4, fixed_abs, tag = 'smem constant byte address 0x4 - core index']
  #allocation1 [shape = 'u32[144,128]{1,0:T(1,128)}', space=vmem, size = 0x12000, scoped, tag = 'internal scratch']
  %s0 = inlined_call_operand.vmem [shape: f32[2,256], index: 0, kind: input, shape index: {}]
  %s1 = inlined_call_operand.vmem [shape: f32[2,256], index: 1, kind: input, shape index: {}]
  %s2 = inlined_call_operand.hbm [shape: bf16[256,128], index: 2, kind: input, shape index: {}]
  %s3 = inlined_call_operand.vmem [shape: f32[1,128], index: 3, kind: input, shape index: {}]
  %s4 = inlined_call_operand.hbm [shape: bf16[512,512], index: 4, kind: input, shape index: {}]
  %s5 = inlined_call_operand.vmem [shape: f32[1,512], index: 5, kind: input, shape index: {}]
  %s6 = inlined_call_operand.hbm [shape: bf16[512,128], index: 6, kind: input, shape index: {}]
  %s7 = inlined_call_operand.vmem [shape: f32[1,128], index: 7, kind: input, shape index: {}]
  %s8 = inlined_call_operand.hbm [shape: f32[2,3], index: 8, kind: output, shape index: {}]
  %s9 = sld [smem:[#allocation0]]
  $region54: #{snli_forward.1} parent=0
    _
  %s11 = ssub.s32 1, %s9
  %s12 = scalar_select 0, %s11, %s9
  $region1: #{snli_forward.1} parent=0
    #allocation2 [shape = 'u8[65536]{0}', space=vmem, size = 0x10000, scoped, tag = 'input window, operand 2, single buffered']
    #allocation3 [shape = 's32[1]{0}', space=sflag, size = 0x4, scoped, tag = 'scoped memory for snli_forward.1']
    #allocation4 [shape = 's32[1]{0}', space=sflag, size = 0x4, scoped, tag = 'scoped memory for snli_forward.1']
    #allocation5 [shape = 'u8[524288]{0}', space=vmem, size = 0x80000, scoped, tag = 'input window, operand 4, single buffered']
    #allocation6 [shape = 's32[1]{0}', space=sflag, size = 0x4, scoped, tag = 'scoped memory for snli_forward.1']
    #allocation7 [shape = 'u8[131072]{0}', space=vmem, size = 0x20000, scoped, tag = 'input window, operand 6, single buffered']
    #allocation8 [shape = 'u8[1024]{0}', space=vmem, size = 0x400, scoped, tag = 'output window, operand 0, single buffered']
    %13 = vsyncpa [#allocation3], 0
    %14 = vsyncpa [#allocation6], 0
    %15 = vsyncpa [#allocation4], 0
    // Predicated region
    $region2: #{snli_forward.1} parent=1 // pred_check
      _
    $region3: #{snli_forward.1} parent=1 // pred_check_branch
      %17 = sbr.rel (0) target = $region5
    $region4: #{snli_forward.1} parent=1 // pred_region
      _
    $region5: #{snli_forward.1} parent=1 // pred_fallthru
      _
    // Predicated region
    $region6: #{snli_forward.1} parent=1 // pred_check
      _
    $region7: #{snli_forward.1} parent=1 // pred_check_branch
      %19 = sbr.rel (0) target = $region9
    $region8: #{snli_forward.1} parent=1 // pred_region
      _
    $region9: #{snli_forward.1} parent=1 // pred_fallthru
      _
    // Predicated region
    $region10: #{snli_forward.1} parent=1 // pred_check
      _
    $region11: #{snli_forward.1} parent=1 // pred_check_branch
      %21 = sbr.rel (0) target = $region13
    $region12: #{snli_forward.1} parent=1 // pred_region
      %s23 = ssub.s32 2048, 2048
      %24 = vsyncadd [#allocation3], %s23
      %s25 = sshll.u32 [#allocation2], 4
      %s26 = int_to_ptr.vmem [resolvable:$true] %s25
      %31 = dma.hbm_to_vmem [thread:$0]  %s2, 2048, %s26, [#allocation3], 64, 64, 4
    $region13: #{snli_forward.1} parent=1 // pred_fallthru
      _
    // Predicated region
    $region14: #{snli_forward.1} parent=1 // pred_check
      _
    $region15: #{snli_forward.1} parent=1 // pred_check_branch
      %33 = sbr.rel (0) target = $region17
    $region16: #{snli_forward.1} parent=1 // pred_region
      _
    $region17: #{snli_forward.1} parent=1 // pred_fallthru
      _
    // Predicated region
    $region18: #{snli_forward.1} parent=1 // pred_check
      _
    $region19: #{snli_forward.1} parent=1 // pred_check_branch
      %35 = sbr.rel (0) target = $region21
    $region20: #{snli_forward.1} parent=1 // pred_region
      %s37 = ssub.s32 16384, 16384
      %38 = vsyncadd [#allocation6], %s37
      %s39 = sshll.u32 [#allocation5], 4
      %s40 = int_to_ptr.vmem [resolvable:$true] %s39
      %45 = dma.hbm_to_vmem [thread:$0]  %s4, 16384, %s40, [#allocation6], 256, 256, 16
    $region21: #{snli_forward.1} parent=1 // pred_fallthru
      _
    // Predicated region
    $region22: #{snli_forward.1} parent=1 // pred_check
      _
    $region23: #{snli_forward.1} parent=1 // pred_check_branch
      %47 = sbr.rel (0) target = $region25
    $region24: #{snli_forward.1} parent=1 // pred_region
      _
    $region25: #{snli_forward.1} parent=1 // pred_fallthru
      _
    // Predicated region
    $region26: #{snli_forward.1} parent=1 // pred_check
      _
    $region27: #{snli_forward.1} parent=1 // pred_check_branch
      %49 = sbr.rel (0) target = $region29
    $region28: #{snli_forward.1} parent=1 // pred_region
      %s51 = ssub.s32 4096, 4096
      %52 = vsyncadd [#allocation6], %s51
      %s53 = sshll.u32 [#allocation7], 4
      %s54 = int_to_ptr.vmem [resolvable:$true] %s53
      %59 = dma.hbm_to_vmem [thread:$0]  %s6, 4096, %s54, [#allocation6], 64, 64, 4
    $region29: #{snli_forward.1} parent=1 // pred_fallthru
      _
    // Predicated region
    $region30: #{snli_forward.1} parent=1 // pred_check
      _
    $region31: #{snli_forward.1} parent=1 // pred_check_branch
      %61 = sbr.rel (0) target = $region33
    $region32: #{snli_forward.1} parent=1 // pred_region
      _
    $region33: #{snli_forward.1} parent=1 // pred_fallthru
      _
    // Predicated region
    $region34: #{snli_forward.1} parent=1 // pred_check
      _
    $region35: #{snli_forward.1} parent=1 // pred_check_branch
      %63 = sbr.rel (0) target = $region37
    $region36: #{snli_forward.1} parent=1 // pred_region
      %64 = dma.done [#allocation3], 2048
    $region37: #{snli_forward.1} parent=1 // pred_fallthru
      _
    // Predicated region
    $region38: #{snli_forward.1} parent=1 // pred_check
      _
    $region39: #{snli_forward.1} parent=1 // pred_check_branch
      %66 = sbr.rel (0) target = $region41
    $region40: #{snli_forward.1} parent=1 // pred_region
      %67 = dma.done [#allocation6], 16384
    $region41: #{snli_forward.1} parent=1 // pred_fallthru
      _
    // Predicated region
    $region42: #{snli_forward.1} parent=1 // pred_check
      _
    $region43: #{snli_forward.1} parent=1 // pred_check_branch
      %69 = sbr.rel (0) target = $region45
    $region44: #{snli_forward.1} parent=1 // pred_region
      %70 = dma.done [#allocation6], 4096
    $region45: #{snli_forward.1} parent=1 // pred_fallthru
      _
    %v72 = vld [vmem:[%s0] sm:$0xf]
    %v75 = vunpack.c.l.s4 1983009808
    %v76 = vunpack.c.0.s8 %v75
    %v77 = vlaneseq
    %v78 = vshrl.u32 %v77, 7
    %v79 = vsub.s32 %v76, %v78
    %v80 = vrot.slane %v72, %v79
    %v81 = vcombine.high %v80, %v80
    %v84 = vpack.c.bf16 %v80, %v80
    %v85 = vpack.c.bf16 %v81, %v81
    %v86 = vld [vmem:[#allocation2] sm:$0xf]
    %v87 = vld [vmem:[#allocation2 + $0x4] sm:$0xf]
    %v88 = vld [vmem:[#allocation2 + $0x8] sm:$0xf]
    %v89 = vld [vmem:[#allocation2 + $0xc] sm:$0xf]
    %v90 = vld [vmem:[#allocation2 + $0x10] sm:$0xf]
    %v91 = vld [vmem:[#allocation2 + $0x14] sm:$0xf]
    %v92 = vld [vmem:[#allocation2 + $0x18] sm:$0xf]
    %v93 = vld [vmem:[#allocation2 + $0x1c] sm:$0xf]
    %v94 = vld [vmem:[#allocation2 + $0x20] sm:$0xf]
    %v95 = vld [vmem:[#allocation2 + $0x24] sm:$0xf]
    %v96 = vld [vmem:[#allocation2 + $0x28] sm:$0xf]
    %v97 = vld [vmem:[#allocation2 + $0x2c] sm:$0xf]
    %v98 = vld [vmem:[#allocation2 + $0x30] sm:$0xf]
    %v99 = vld [vmem:[#allocation2 + $0x34] sm:$0xf]
    %v100 = vld [vmem:[#allocation2 + $0x38] sm:$0xf]
    %v101 = vld [vmem:[#allocation2 + $0x3c] sm:$0xf]
    %v102 = vld [vmem:[#allocation2 + $0x40] sm:$0xf]
    %v103 = vld [vmem:[#allocation2 + $0x44] sm:$0xf]
    %v104 = vld [vmem:[#allocation2 + $0x48] sm:$0xf]
    %v105 = vld [vmem:[#allocation2 + $0x4c] sm:$0xf]
    %v106 = vld [vmem:[#allocation2 + $0x50] sm:$0xf]
    %v107 = vld [vmem:[#allocation2 + $0x54] sm:$0xf]
    %v108 = vld [vmem:[#allocation2 + $0x58] sm:$0xf]
    %v109 = vld [vmem:[#allocation2 + $0x5c] sm:$0xf]
    %v110 = vld [vmem:[#allocation2 + $0x60] sm:$0xf]
    %v111 = vld [vmem:[#allocation2 + $0x64] sm:$0xf]
    %v112 = vld [vmem:[#allocation2 + $0x68] sm:$0xf]
    %v113 = vld [vmem:[#allocation2 + $0x6c] sm:$0xf]
    %v114 = vld [vmem:[#allocation2 + $0x70] sm:$0xf]
    %v115 = vld [vmem:[#allocation2 + $0x74] sm:$0xf]
    %v116 = vld [vmem:[#allocation2 + $0x78] sm:$0xf]
    %v117 = vld [vmem:[#allocation2 + $0x7c] sm:$0xf]
    %v118 = vld [vmem:[%s3] sm:$0x1]
    %v120 = vlaneseq
    %v121 = vshrl.u32 %v120, 7
    %v122 = vsub.s32 0, %v121
    %v123 = vrot.slane %v118, %v122
    %v157 = vunpack.c.l.b16 %v86
    %v158 = vunpack.c.l.b16 %v87
    %v159 = vunpack.c.l.b16 %v88
    %v160 = vunpack.c.l.b16 %v89
    %v161 = vunpack.c.l.b16 %v90
    %v162 = vunpack.c.l.b16 %v91
    %v163 = vunpack.c.l.b16 %v92
    %v164 = vunpack.c.l.b16 %v93
    %v165 = vunpack.c.l.b16 %v94
    %v166 = vunpack.c.l.b16 %v95
    %v167 = vunpack.c.l.b16 %v96
    %v168 = vunpack.c.l.b16 %v97
    %v169 = vunpack.c.l.b16 %v98
    %v170 = vunpack.c.l.b16 %v99
    %v171 = vunpack.c.l.b16 %v100
    %v172 = vunpack.c.l.b16 %v101
    %v173 = vunpack.c.l.b16 %v102
    %v174 = vunpack.c.l.b16 %v103
    %v175 = vunpack.c.l.b16 %v104
    %v176 = vunpack.c.l.b16 %v105
    %v177 = vunpack.c.l.b16 %v106
    %v178 = vunpack.c.l.b16 %v107
    %v179 = vunpack.c.l.b16 %v108
    %v180 = vunpack.c.l.b16 %v109
    %v181 = vunpack.c.l.b16 %v110
    %v182 = vunpack.c.l.b16 %v111
    %v183 = vunpack.c.l.b16 %v112
    %v184 = vunpack.c.l.b16 %v113
    %v185 = vunpack.c.l.b16 %v114
    %v186 = vunpack.c.l.b16 %v115
    %v187 = vunpack.c.l.b16 %v116
    %v188 = vunpack.c.l.b16 %v117
    %v189 = vpack.c.b16 %v158, %v157
    %v190 = vpack.c.b16 %v160, %v159
    %v191 = vpack.c.b16 %v162, %v161
    %v192 = vpack.c.b16 %v164, %v163
    %v193 = vpack.c.b16 %v166, %v165
    %v194 = vpack.c.b16 %v168, %v167
    %v195 = vpack.c.b16 %v170, %v169
    %v196 = vpack.c.b16 %v172, %v171
    %v197 = vpack.c.b16 %v174, %v173
    %v198 = vpack.c.b16 %v176, %v175
    %v199 = vpack.c.b16 %v178, %v177
    %v200 = vpack.c.b16 %v180, %v179
    %v201 = vpack.c.b16 %v182, %v181
    %v202 = vpack.c.b16 %v184, %v183
    %v203 = vpack.c.b16 %v186, %v185
    %v204 = vpack.c.b16 %v188, %v187
    %221 = vmatprep.subr.bf16.mxu0 0
    %222 = vmatpush1.bf16.msra.mxu0 %v189
    %223 = vmatprep.subr.bf16.mxu0 0
    %224 = vmatpush1.bf16.msra.mxu0 %v190
    %225 = vmatprep.subr.bf16.mxu0 0
    %226 = vmatpush1.bf16.msra.mxu0 %v191
    %227 = vmatprep.subr.bf16.mxu0 0
    %228 = vmatpush1.bf16.msra.mxu0 %v192
    %229 = vmatprep.subr.bf16.mxu0 0
    %230 = vmatpush1.bf16.msra.mxu0 %v193
    %231 = vmatprep.subr.bf16.mxu0 0
    %232 = vmatpush1.bf16.msra.mxu0 %v194
    %233 = vmatprep.subr.bf16.mxu0 0
    %234 = vmatpush1.bf16.msra.mxu0 %v195
    %235 = vmatprep.subr.bf16.mxu0 0
    %236 = vmatpush1.bf16.msra.mxu0 %v196
    %237 = vmatprep.subr.bf16.mxu0 0
    %238 = vmatpush1.bf16.msra.mxu0 %v197
    %239 = vmatprep.subr.bf16.mxu0 0
    %240 = vmatpush1.bf16.msra.mxu0 %v198
    %241 = vmatprep.subr.bf16.mxu0 0
    %242 = vmatpush1.bf16.msra.mxu0 %v199
    %243 = vmatprep.subr.bf16.mxu0 0
    %244 = vmatpush1.bf16.msra.mxu0 %v200
    %245 = vmatprep.subr.bf16.mxu0 0
    %246 = vmatpush1.bf16.msra.mxu0 %v201
    %247 = vmatprep.subr.bf16.mxu0 0
    %248 = vmatpush1.bf16.msra.mxu0 %v202
    %249 = vmatprep.subr.bf16.mxu0 0
    %250 = vmatpush1.bf16.msra.mxu0 %v203
    %251 = vmatprep.subr.bf16.mxu0 0
    %252 = vmatpush1.bf16.msra.mxu0 %v204
    %253 = vmatprep.mubr.bf16.mxu0 %v85
    %254 = vmatmul.mubr.bf16.gmra.mrb[0].mxu0 %v84
    %v255 = vpop.f32.mrb[0].mxu0
    %v256 = vadd.f32 %v123, %v255
    %v257 = vpop.f32.mrb[0].mxu0
    %v258 = vpop.f32.mrb[0].mxu0
    %v259 = vpop.f32.mrb[0].mxu0
    %260 = vdwg.mxu0
    %v261 = vld [vmem:[%s1] sm:$0xf]
    %v264 = vunpack.c.l.s4 1983009808
    %v265 = vunpack.c.0.s8 %v264
    %v266 = vlaneseq
    %v267 = vshrl.u32 %v266, 7
    %v268 = vsub.s32 %v265, %v267
    %v269 = vrot.slane %v261, %v268
    %v270 = vcombine.high %v269, %v269
    %v273 = vpack.c.bf16 %v269, %v269
    %v274 = vpack.c.bf16 %v270, %v270
    %275 = vmatprep.subr.bf16.mxu0 0
    %276 = vmatpush1.bf16.msra.mxu0 %v189
    %277 = vmatprep.subr.bf16.mxu0 0
    %278 = vmatpush1.bf16.msra.mxu0 %v190
    %279 = vmatprep.subr.bf16.mxu0 0
    %280 = vmatpush1.bf16.msra.mxu0 %v191
    %281 = vmatprep.subr.bf16.mxu0 0
    %282 = vmatpush1.bf16.msra.mxu0 %v192
    %283 = vmatprep.subr.bf16.mxu0 0
    %284 = vmatpush1.bf16.msra.mxu0 %v193
    %285 = vmatprep.subr.bf16.mxu0 0
    %286 = vmatpush1.bf16.msra.mxu0 %v194
    %287 = vmatprep.subr.bf16.mxu0 0
    %288 = vmatpush1.bf16.msra.mxu0 %v195
    %289 = vmatprep.subr.bf16.mxu0 0
    %290 = vmatpush1.bf16.msra.mxu0 %v196
    %291 = vmatprep.subr.bf16.mxu0 0
    %292 = vmatpush1.bf16.msra.mxu0 %v197
    %293 = vmatprep.subr.bf16.mxu0 0
    %294 = vmatpush1.bf16.msra.mxu0 %v198
    %295 = vmatprep.subr.bf16.mxu0 0
    %296 = vmatpush1.bf16.msra.mxu0 %v199
    %297 = vmatprep.subr.bf16.mxu0 0
    %298 = vmatpush1.bf16.msra.mxu0 %v200
    %299 = vmatprep.subr.bf16.mxu0 0
    %300 = vmatpush1.bf16.msra.mxu0 %v201
    %301 = vmatprep.subr.bf16.mxu0 0
    %302 = vmatpush1.bf16.msra.mxu0 %v202
    %303 = vmatprep.subr.bf16.mxu0 0
    %304 = vmatpush1.bf16.msra.mxu0 %v203
    %305 = vmatprep.subr.bf16.mxu0 0
    %306 = vmatpush1.bf16.msra.mxu0 %v204
    %307 = vmatprep.mubr.bf16.mxu0 %v274
    %308 = vmatmul.mubr.bf16.gmra.mrb[0].mxu0 %v273
    %v309 = vpop.f32.mrb[0].mxu0
    %v310 = vadd.f32 %v123, %v309
    %v311 = vpop.f32.mrb[0].mxu0
    %v312 = vpop.f32.mrb[0].mxu0
    %v313 = vpop.f32.mrb[0].mxu0
    %314 = vdwg.mxu0
    %v315 = vmax.f32 %v256, 0.0
    %v316 = vmax.f32 %v310, 0.0
    %v317 = vsub.f32 %v315, %v316
    %v318 = vand.u32 2147483647, %v317
    %v319 = vmul.f32 %v315, %v316
    %v320 = vpack.c.bf16 %v315, %v315
    %v321 = vpack.c.bf16 %v316, %v316
    %v322 = vpack.c.bf16 %v318, %v318
    %v323 = vpack.c.bf16 %v319, %v319
    %v324 = vld [vmem:[#allocation5] sm:$0xff]
    %v325 = vld [vmem:[#allocation5 + $0x8] sm:$0xff]
    %v326 = vld [vmem:[#allocation5 + $0x10] sm:$0xff]
    %v327 = vld [vmem:[#allocation5 + $0x18] sm:$0xff]
    %v328 = vld [vmem:[#allocation5 + $0x20] sm:$0xff]
    %v329 = vld [vmem:[#allocation5 + $0x28] sm:$0xff]
    %v330 = vld [vmem:[#allocation5 + $0x30] sm:$0xff]
    %v331 = vld [vmem:[#allocation5 + $0x38] sm:$0xff]
    %v332 = vld [vmem:[#allocation5 + $0x40] sm:$0xff]
    %v333 = vld [vmem:[#allocation5 + $0x48] sm:$0xff]
    %v334 = vld [vmem:[#allocation5 + $0x50] sm:$0xff]
    %v335 = vld [vmem:[#allocation5 + $0x58] sm:$0xff]
    %v336 = vld [vmem:[#allocation5 + $0x60] sm:$0xff]
    %v337 = vld [vmem:[#allocation5 + $0x68] sm:$0xff]
    %v338 = vld [vmem:[#allocation5 + $0x70] sm:$0xff]
    %v339 = vld [vmem:[#allocation5 + $0x78] sm:$0xff]
    %v340 = vld [vmem:[#allocation5 + $0x80] sm:$0xff]
    %v341 = vld [vmem:[#allocation5 + $0x88] sm:$0xff]
    %v342 = vld [vmem:[#allocation5 + $0x90] sm:$0xff]
    %v343 = vld [vmem:[#allocation5 + $0x98] sm:$0xff]
    %v344 = vld [vmem:[#allocation5 + $0xa0] sm:$0xff]
    %v345 = vld [vmem:[#allocation5 + $0xa8] sm:$0xff]
    %v346 = vld [vmem:[#allocation5 + $0xb0] sm:$0xff]
    %v347 = vld [vmem:[#allocation5 + $0xb8] sm:$0xff]
    %v348 = vld [vmem:[#allocation5 + $0xc0] sm:$0xff]
    %v349 = vld [vmem:[#allocation5 + $0xc8] sm:$0xff]
    %v350 = vld [vmem:[#allocation5 + $0xd0] sm:$0xff]
    %v351 = vld [vmem:[#allocation5 + $0xd8] sm:$0xff]
    %v352 = vld [vmem:[#allocation5 + $0xe0] sm:$0xff]
    %v353 = vld [vmem:[#allocation5 + $0xe8] sm:$0xff]
    %v354 = vld [vmem:[#allocation5 + $0xf0] sm:$0xff]
    %v355 = vld [vmem:[#allocation5 + $0xf8] sm:$0xff]
    %v356 = vld [vmem:[#allocation5 + $0x100] sm:$0xff]
    %v357 = vld [vmem:[#allocation5 + $0x108] sm:$0xff]
    %v358 = vld [vmem:[#allocation5 + $0x110] sm:$0xff]
    %v359 = vld [vmem:[#allocation5 + $0x118] sm:$0xff]
    %v360 = vld [vmem:[#allocation5 + $0x120] sm:$0xff]
    %v361 = vld [vmem:[#allocation5 + $0x128] sm:$0xff]
    %v362 = vld [vmem:[#allocation5 + $0x130] sm:$0xff]
    %v363 = vld [vmem:[#allocation5 + $0x138] sm:$0xff]
    %v364 = vld [vmem:[#allocation5 + $0x140] sm:$0xff]
    %v365 = vld [vmem:[#allocation5 + $0x148] sm:$0xff]
    %v366 = vld [vmem:[#allocation5 + $0x150] sm:$0xff]
    %v367 = vld [vmem:[#allocation5 + $0x158] sm:$0xff]
    %v368 = vld [vmem:[#allocation5 + $0x160] sm:$0xff]
    %v369 = vld [vmem:[#allocation5 + $0x168] sm:$0xff]
    %v370 = vld [vmem:[#allocation5 + $0x170] sm:$0xff]
    %v371 = vld [vmem:[#allocation5 + $0x178] sm:$0xff]
    %v372 = vld [vmem:[#allocation5 + $0x180] sm:$0xff]
    %v373 = vld [vmem:[#allocation5 + $0x188] sm:$0xff]
    %v374 = vld [vmem:[#allocation5 + $0x190] sm:$0xff]
    %v375 = vld [vmem:[#allocation5 + $0x198] sm:$0xff]
    %v376 = vld [vmem:[#allocation5 + $0x1a0] sm:$0xff]
    %v377 = vld [vmem:[#allocation5 + $0x1a8] sm:$0xff]
    %v378 = vld [vmem:[#allocation5 + $0x1b0] sm:$0xff]
    %v379 = vld [vmem:[#allocation5 + $0x1b8] sm:$0xff]
    %v380 = vld [vmem:[#allocation5 + $0x1c0] sm:$0xff]
    %v381 = vld [vmem:[#allocation5 + $0x1c8] sm:$0xff]
    %v382 = vld [vmem:[#allocation5 + $0x1d0] sm:$0xff]
    %v383 = vld [vmem:[#allocation5 + $0x1d8] sm:$0xff]
    %v384 = vld [vmem:[#allocation5 + $0x1e0] sm:$0xff]
    %v385 = vld [vmem:[#allocation5 + $0x1e8] sm:$0xff]
    %v386 = vld [vmem:[#allocation5 + $0x1f0] sm:$0xff]
    %v387 = vld [vmem:[#allocation5 + $0x1f8] sm:$0xff]
    %v388 = vld [vmem:[#allocation5 + $0x200] sm:$0xff]
    %v389 = vld [vmem:[#allocation5 + $0x208] sm:$0xff]
    %v390 = vld [vmem:[#allocation5 + $0x210] sm:$0xff]
    %v391 = vld [vmem:[#allocation5 + $0x218] sm:$0xff]
    %v392 = vld [vmem:[#allocation5 + $0x220] sm:$0xff]
    %v393 = vld [vmem:[#allocation5 + $0x228] sm:$0xff]
    %v394 = vld [vmem:[#allocation5 + $0x230] sm:$0xff]
    %v395 = vld [vmem:[#allocation5 + $0x238] sm:$0xff]
    %v396 = vld [vmem:[#allocation5 + $0x240] sm:$0xff]
    %v397 = vld [vmem:[#allocation5 + $0x248] sm:$0xff]
    %v398 = vld [vmem:[#allocation5 + $0x250] sm:$0xff]
    %v399 = vld [vmem:[#allocation5 + $0x258] sm:$0xff]
    %v400 = vld [vmem:[#allocation5 + $0x260] sm:$0xff]
    %v401 = vld [vmem:[#allocation5 + $0x268] sm:$0xff]
    %v402 = vld [vmem:[#allocation5 + $0x270] sm:$0xff]
    %v403 = vld [vmem:[#allocation5 + $0x278] sm:$0xff]
    %v404 = vld [vmem:[#allocation5 + $0x280] sm:$0xff]
    %v405 = vld [vmem:[#allocation5 + $0x288] sm:$0xff]
    %v406 = vld [vmem:[#allocation5 + $0x290] sm:$0xff]
    %v407 = vld [vmem:[#allocation5 + $0x298] sm:$0xff]
    %v408 = vld [vmem:[#allocation5 + $0x2a0] sm:$0xff]
    %v409 = vld [vmem:[#allocation5 + $0x2a8] sm:$0xff]
    %v410 = vld [vmem:[#allocation5 + $0x2b0] sm:$0xff]
    %v411 = vld [vmem:[#allocation5 + $0x2b8] sm:$0xff]
    %v412 = vld [vmem:[#allocation5 + $0x2c0] sm:$0xff]
    %v413 = vld [vmem:[#allocation5 + $0x2c8] sm:$0xff]
    %v414 = vld [vmem:[#allocation5 + $0x2d0] sm:$0xff]
    %v415 = vld [vmem:[#allocation5 + $0x2d8] sm:$0xff]
    %v416 = vld [vmem:[#allocation5 + $0x2e0] sm:$0xff]
    %v417 = vld [vmem:[#allocation5 + $0x2e8] sm:$0xff]
    %v418 = vld [vmem:[#allocation5 + $0x2f0] sm:$0xff]
    %v419 = vld [vmem:[#allocation5 + $0x2f8] sm:$0xff]
    %v420 = vld [vmem:[#allocation5 + $0x300] sm:$0xff]
    %v421 = vld [vmem:[#allocation5 + $0x308] sm:$0xff]
    %v422 = vld [vmem:[#allocation5 + $0x310] sm:$0xff]
    %v423 = vld [vmem:[#allocation5 + $0x318] sm:$0xff]
    %v424 = vld [vmem:[#allocation5 + $0x320] sm:$0xff]
    %v425 = vld [vmem:[#allocation5 + $0x328] sm:$0xff]
    %v426 = vld [vmem:[#allocation5 + $0x330] sm:$0xff]
    %v427 = vld [vmem:[#allocation5 + $0x338] sm:$0xff]
    %v428 = vld [vmem:[#allocation5 + $0x340] sm:$0xff]
    %v429 = vld [vmem:[#allocation5 + $0x348] sm:$0xff]
    %v430 = vld [vmem:[#allocation5 + $0x350] sm:$0xff]
    %v431 = vld [vmem:[#allocation5 + $0x358] sm:$0xff]
    %v432 = vld [vmem:[#allocation5 + $0x360] sm:$0xff]
    %v433 = vld [vmem:[#allocation5 + $0x368] sm:$0xff]
    %v434 = vld [vmem:[#allocation5 + $0x370] sm:$0xff]
    %v435 = vld [vmem:[#allocation5 + $0x378] sm:$0xff]
    %v436 = vld [vmem:[#allocation5 + $0x380] sm:$0xff]
    %v437 = vld [vmem:[#allocation5 + $0x388] sm:$0xff]
    %v438 = vld [vmem:[#allocation5 + $0x390] sm:$0xff]
    %v439 = vld [vmem:[#allocation5 + $0x398] sm:$0xff]
    %v440 = vld [vmem:[#allocation5 + $0x3a0] sm:$0xff]
    %v441 = vld [vmem:[#allocation5 + $0x3a8] sm:$0xff]
    %v442 = vld [vmem:[#allocation5 + $0x3b0] sm:$0xff]
    %v443 = vld [vmem:[#allocation5 + $0x3b8] sm:$0xff]
    %v444 = vld [vmem:[#allocation5 + $0x3c0] sm:$0xff]
    %v445 = vld [vmem:[#allocation5 + $0x3c8] sm:$0xff]
    %v446 = vld [vmem:[#allocation5 + $0x3d0] sm:$0xff]
    %v447 = vld [vmem:[#allocation5 + $0x3d8] sm:$0xff]
    %v448 = vld [vmem:[#allocation5 + $0x3e0] sm:$0xff]
    %v449 = vld [vmem:[#allocation5 + $0x3e8] sm:$0xff]
    %v450 = vld [vmem:[#allocation5 + $0x3f0] sm:$0xff]
    %v451 = vld [vmem:[#allocation5 + $0x3f8] sm:$0xff]
    %v452 = vld [vmem:[%s5] sm:$0xf]
    %v454 = vlaneseq
    %v455 = vshrl.u32 %v454, 7
    %v456 = vsub.s32 0, %v455
    %v457 = vrot.slane %v452, %v456
    %v458 = vlaneseq
    %v459 = vshrl.u32 %v458, 7
    %v460 = vsub.s32 1, %v459
    %v461 = vrot.slane %v452, %v460
    %v462 = vlaneseq
    %v463 = vshrl.u32 %v462, 7
    %v464 = vsub.s32 2, %v463
    %v465 = vrot.slane %v452, %v464
    %v466 = vlaneseq
    %v467 = vshrl.u32 %v466, 7
    %v468 = vsub.s32 3, %v467
    %v469 = vrot.slane %v452, %v468
    %v602 = vunpack.c.l.b16 %v324
    %v603 = vunpack.c.h.b16 %v324
    %v604 = vunpack.c.l.b16 %v325
    %v605 = vunpack.c.h.b16 %v325
    %v606 = vunpack.c.l.b16 %v326
    %v607 = vunpack.c.h.b16 %v326
    %v608 = vunpack.c.l.b16 %v327
    %v609 = vunpack.c.h.b16 %v327
    %v610 = vunpack.c.l.b16 %v328
    %v611 = vunpack.c.h.b16 %v328
    %v612 = vunpack.c.l.b16 %v329
    %v613 = vunpack.c.h.b16 %v329
    %v614 = vunpack.c.l.b16 %v330
    %v615 = vunpack.c.h.b16 %v330
    %v616 = vunpack.c.l.b16 %v331
    %v617 = vunpack.c.h.b16 %v331
    %v618 = vunpack.c.l.b16 %v332
    %v619 = vunpack.c.h.b16 %v332
    %v620 = vunpack.c.l.b16 %v333
    %v621 = vunpack.c.h.b16 %v333
    %v622 = vunpack.c.l.b16 %v334
    %v623 = vunpack.c.h.b16 %v334
    %v624 = vunpack.c.l.b16 %v335
    %v625 = vunpack.c.h.b16 %v335
    %v626 = vunpack.c.l.b16 %v336
    %v627 = vunpack.c.h.b16 %v336
    %v628 = vunpack.c.l.b16 %v337
    %v629 = vunpack.c.h.b16 %v337
    %v630 = vunpack.c.l.b16 %v338
    %v631 = vunpack.c.h.b16 %v338
    %v632 = vunpack.c.l.b16 %v339
    %v633 = vunpack.c.h.b16 %v339
    %v634 = vunpack.c.l.b16 %v340
    %v635 = vunpack.c.h.b16 %v340
    %v636 = vunpack.c.l.b16 %v341
    %v637 = vunpack.c.h.b16 %v341
    %v638 = vunpack.c.l.b16 %v342
    %v639 = vunpack.c.h.b16 %v342
    %v640 = vunpack.c.l.b16 %v343
    %v641 = vunpack.c.h.b16 %v343
    %v642 = vunpack.c.l.b16 %v344
    %v643 = vunpack.c.h.b16 %v344
    %v644 = vunpack.c.l.b16 %v345
    %v645 = vunpack.c.h.b16 %v345
    %v646 = vunpack.c.l.b16 %v346
    %v647 = vunpack.c.h.b16 %v346
    %v648 = vunpack.c.l.b16 %v347
    %v649 = vunpack.c.h.b16 %v347
    %v650 = vunpack.c.l.b16 %v348
    %v651 = vunpack.c.h.b16 %v348
    %v652 = vunpack.c.l.b16 %v349
    %v653 = vunpack.c.h.b16 %v349
    %v654 = vunpack.c.l.b16 %v350
    %v655 = vunpack.c.h.b16 %v350
    %v656 = vunpack.c.l.b16 %v351
    %v657 = vunpack.c.h.b16 %v351
    %v658 = vunpack.c.l.b16 %v352
    %v659 = vunpack.c.h.b16 %v352
    %v660 = vunpack.c.l.b16 %v353
    %v661 = vunpack.c.h.b16 %v353
    %v662 = vunpack.c.l.b16 %v354
    %v663 = vunpack.c.h.b16 %v354
    %v664 = vunpack.c.l.b16 %v355
    %v665 = vunpack.c.h.b16 %v355
    %v666 = vunpack.c.l.b16 %v356
    %v667 = vunpack.c.h.b16 %v356
    %v668 = vunpack.c.l.b16 %v357
    %v669 = vunpack.c.h.b16 %v357
    %v670 = vunpack.c.l.b16 %v358
    %v671 = vunpack.c.h.b16 %v358
    %v672 = vunpack.c.l.b16 %v359
    %v673 = vunpack.c.h.b16 %v359
    %v674 = vunpack.c.l.b16 %v360
    %v675 = vunpack.c.h.b16 %v360
    %v676 = vunpack.c.l.b16 %v361
    %v677 = vunpack.c.h.b16 %v361
    %v678 = vunpack.c.l.b16 %v362
    %v679 = vunpack.c.h.b16 %v362
    %v680 = vunpack.c.l.b16 %v363
    %v681 = vunpack.c.h.b16 %v363
    %v682 = vunpack.c.l.b16 %v364
    %v683 = vunpack.c.h.b16 %v364
    %v684 = vunpack.c.l.b16 %v365
    %v685 = vunpack.c.h.b16 %v365
    %v686 = vunpack.c.l.b16 %v366
    %v687 = vunpack.c.h.b16 %v366
    %v688 = vunpack.c.l.b16 %v367
    %v689 = vunpack.c.h.b16 %v367
    %v690 = vunpack.c.l.b16 %v368
    %v691 = vunpack.c.h.b16 %v368
    %v692 = vunpack.c.l.b16 %v369
    %v693 = vunpack.c.h.b16 %v369
    %v694 = vunpack.c.l.b16 %v370
    %v695 = vunpack.c.h.b16 %v370
    %v696 = vunpack.c.l.b16 %v371
    %v697 = vunpack.c.h.b16 %v371
    %v698 = vunpack.c.l.b16 %v372
    %v699 = vunpack.c.h.b16 %v372
    %v700 = vunpack.c.l.b16 %v373
    %v701 = vunpack.c.h.b16 %v373
    %v702 = vunpack.c.l.b16 %v374
    %v703 = vunpack.c.h.b16 %v374
    %v704 = vunpack.c.l.b16 %v375
    %v705 = vunpack.c.h.b16 %v375
    %v706 = vunpack.c.l.b16 %v376
    %v707 = vunpack.c.h.b16 %v376
    %v708 = vunpack.c.l.b16 %v377
    %v709 = vunpack.c.h.b16 %v377
    %v710 = vunpack.c.l.b16 %v378
    %v711 = vunpack.c.h.b16 %v378
    %v712 = vunpack.c.l.b16 %v379
    %v713 = vunpack.c.h.b16 %v379
    %v714 = vunpack.c.l.b16 %v380
    %v715 = vunpack.c.h.b16 %v380
    %v716 = vunpack.c.l.b16 %v381
    %v717 = vunpack.c.h.b16 %v381
    %v718 = vunpack.c.l.b16 %v382
    %v719 = vunpack.c.h.b16 %v382
    %v720 = vunpack.c.l.b16 %v383
    %v721 = vunpack.c.h.b16 %v383
    %v722 = vunpack.c.l.b16 %v384
    %v723 = vunpack.c.h.b16 %v384
    %v724 = vunpack.c.l.b16 %v385
    %v725 = vunpack.c.h.b16 %v385
    %v726 = vunpack.c.l.b16 %v386
    %v727 = vunpack.c.h.b16 %v386
    %v728 = vunpack.c.l.b16 %v387
    %v729 = vunpack.c.h.b16 %v387
    %v730 = vunpack.c.l.b16 %v388
    %v731 = vunpack.c.h.b16 %v388
    %v732 = vunpack.c.l.b16 %v389
    %v733 = vunpack.c.h.b16 %v389
    %v734 = vunpack.c.l.b16 %v390
    %v735 = vunpack.c.h.b16 %v390
    %v736 = vunpack.c.l.b16 %v391
    %v737 = vunpack.c.h.b16 %v391
    %v738 = vunpack.c.l.b16 %v392
    %v739 = vunpack.c.h.b16 %v392
    %v740 = vunpack.c.l.b16 %v393
    %v741 = vunpack.c.h.b16 %v393
    %v742 = vunpack.c.l.b16 %v394
    %v743 = vunpack.c.h.b16 %v394
    %v744 = vunpack.c.l.b16 %v395
    %v745 = vunpack.c.h.b16 %v395
    %v746 = vunpack.c.l.b16 %v396
    %v747 = vunpack.c.h.b16 %v396
    %v748 = vunpack.c.l.b16 %v397
    %v749 = vunpack.c.h.b16 %v397
    %v750 = vunpack.c.l.b16 %v398
    %v751 = vunpack.c.h.b16 %v398
    %v752 = vunpack.c.l.b16 %v399
    %v753 = vunpack.c.h.b16 %v399
    %v754 = vunpack.c.l.b16 %v400
    %v755 = vunpack.c.h.b16 %v400
    %v756 = vunpack.c.l.b16 %v401
    %v757 = vunpack.c.h.b16 %v401
    %v758 = vunpack.c.l.b16 %v402
    %v759 = vunpack.c.h.b16 %v402
    %v760 = vunpack.c.l.b16 %v403
    %v761 = vunpack.c.h.b16 %v403
    %v762 = vunpack.c.l.b16 %v404
    %v763 = vunpack.c.h.b16 %v404
    %v764 = vunpack.c.l.b16 %v405
    %v765 = vunpack.c.h.b16 %v405
    %v766 = vunpack.c.l.b16 %v406
    %v767 = vunpack.c.h.b16 %v406
    %v768 = vunpack.c.l.b16 %v407
    %v769 = vunpack.c.h.b16 %v407
    %v770 = vunpack.c.l.b16 %v408
    %v771 = vunpack.c.h.b16 %v408
    %v772 = vunpack.c.l.b16 %v409
    %v773 = vunpack.c.h.b16 %v409
    %v774 = vunpack.c.l.b16 %v410
    %v775 = vunpack.c.h.b16 %v410
    %v776 = vunpack.c.l.b16 %v411
    %v777 = vunpack.c.h.b16 %v411
    %v778 = vunpack.c.l.b16 %v412
    %v779 = vunpack.c.h.b16 %v412
    %v780 = vunpack.c.l.b16 %v413
    %v781 = vunpack.c.h.b16 %v413
    %v782 = vunpack.c.l.b16 %v414
    %v783 = vunpack.c.h.b16 %v414
    %v784 = vunpack.c.l.b16 %v415
    %v785 = vunpack.c.h.b16 %v415
    %v786 = vunpack.c.l.b16 %v416
    %v787 = vunpack.c.h.b16 %v416
    %v788 = vunpack.c.l.b16 %v417
    %v789 = vunpack.c.h.b16 %v417
    %v790 = vunpack.c.l.b16 %v418
    %v791 = vunpack.c.h.b16 %v418
    %v792 = vunpack.c.l.b16 %v419
    %v793 = vunpack.c.h.b16 %v419
    %v794 = vunpack.c.l.b16 %v420
    %v795 = vunpack.c.h.b16 %v420
    %v796 = vunpack.c.l.b16 %v421
    %v797 = vunpack.c.h.b16 %v421
    %v798 = vunpack.c.l.b16 %v422
    %v799 = vunpack.c.h.b16 %v422
    %v800 = vunpack.c.l.b16 %v423
    %v801 = vunpack.c.h.b16 %v423
    %v802 = vunpack.c.l.b16 %v424
    %v803 = vunpack.c.h.b16 %v424
    %v804 = vunpack.c.l.b16 %v425
    %v805 = vunpack.c.h.b16 %v425
    %v806 = vunpack.c.l.b16 %v426
    %v807 = vunpack.c.h.b16 %v426
    %v808 = vunpack.c.l.b16 %v427
    %v809 = vunpack.c.h.b16 %v427
    %v810 = vunpack.c.l.b16 %v428
    %v811 = vunpack.c.h.b16 %v428
    %v812 = vunpack.c.l.b16 %v429
    %v813 = vunpack.c.h.b16 %v429
    %v814 = vunpack.c.l.b16 %v430
    %v815 = vunpack.c.h.b16 %v430
    %v816 = vunpack.c.l.b16 %v431
    %v817 = vunpack.c.h.b16 %v431
    %v818 = vunpack.c.l.b16 %v432
    %v819 = vunpack.c.h.b16 %v432
    %v820 = vunpack.c.l.b16 %v433
    %v821 = vunpack.c.h.b16 %v433
    %v822 = vunpack.c.l.b16 %v434
    %v823 = vunpack.c.h.b16 %v434
    %v824 = vunpack.c.l.b16 %v435
    %v825 = vunpack.c.h.b16 %v435
    %v826 = vunpack.c.l.b16 %v436
    %v827 = vunpack.c.h.b16 %v436
    %v828 = vunpack.c.l.b16 %v437
    %v829 = vunpack.c.h.b16 %v437
    %v830 = vunpack.c.l.b16 %v438
    %v831 = vunpack.c.h.b16 %v438
    %v832 = vunpack.c.l.b16 %v439
    %v833 = vunpack.c.h.b16 %v439
    %v834 = vunpack.c.l.b16 %v440
    %v835 = vunpack.c.h.b16 %v440
    %v836 = vunpack.c.l.b16 %v441
    %v837 = vunpack.c.h.b16 %v441
    %v838 = vunpack.c.l.b16 %v442
    %v839 = vunpack.c.h.b16 %v442
    %v840 = vunpack.c.l.b16 %v443
    %v841 = vunpack.c.h.b16 %v443
    %v842 = vunpack.c.l.b16 %v444
    %v843 = vunpack.c.h.b16 %v444
    %v844 = vunpack.c.l.b16 %v445
    %v845 = vunpack.c.h.b16 %v445
    %v846 = vunpack.c.l.b16 %v446
    %v847 = vunpack.c.h.b16 %v446
    %v848 = vunpack.c.l.b16 %v447
    %v849 = vunpack.c.h.b16 %v447
    %v850 = vunpack.c.l.b16 %v448
    %v851 = vunpack.c.h.b16 %v448
    %v852 = vunpack.c.l.b16 %v449
    %v853 = vunpack.c.h.b16 %v449
    %v854 = vunpack.c.l.b16 %v450
    %v855 = vunpack.c.h.b16 %v450
    %v856 = vunpack.c.l.b16 %v451
    %v857 = vunpack.c.h.b16 %v451
    %v858 = vpack.c.b16 %v606, %v602
    %v859 = vpack.c.b16 %v607, %v603
    %v860 = vpack.c.b16 %v608, %v604
    %v861 = vpack.c.b16 %v609, %v605
    %v862 = vpack.c.b16 %v614, %v610
    %v863 = vpack.c.b16 %v615, %v611
    %v864 = vpack.c.b16 %v616, %v612
    %v865 = vpack.c.b16 %v617, %v613
    %v866 = vpack.c.b16 %v622, %v618
    %v867 = vpack.c.b16 %v623, %v619
    %v868 = vpack.c.b16 %v624, %v620
    %v869 = vpack.c.b16 %v625, %v621
    %v870 = vpack.c.b16 %v630, %v626
    %v871 = vpack.c.b16 %v631, %v627
    %v872 = vpack.c.b16 %v632, %v628
    %v873 = vpack.c.b16 %v633, %v629
    %v874 = vpack.c.b16 %v638, %v634
    %v875 = vpack.c.b16 %v639, %v635
    %v876 = vpack.c.b16 %v640, %v636
    %v877 = vpack.c.b16 %v641, %v637
    %v878 = vpack.c.b16 %v646, %v642
    %v879 = vpack.c.b16 %v647, %v643
    %v880 = vpack.c.b16 %v648, %v644
    %v881 = vpack.c.b16 %v649, %v645
    %v882 = vpack.c.b16 %v654, %v650
    %v883 = vpack.c.b16 %v655, %v651
    %v884 = vpack.c.b16 %v656, %v652
    %v885 = vpack.c.b16 %v657, %v653
    %v886 = vpack.c.b16 %v662, %v658
    %v887 = vpack.c.b16 %v663, %v659
    %v888 = vpack.c.b16 %v664, %v660
    %v889 = vpack.c.b16 %v665, %v661
    %v890 = vpack.c.b16 %v670, %v666
    %v891 = vpack.c.b16 %v671, %v667
    %v892 = vpack.c.b16 %v672, %v668
    %v893 = vpack.c.b16 %v673, %v669
    %v894 = vpack.c.b16 %v678, %v674
    %v895 = vpack.c.b16 %v679, %v675
    %v896 = vpack.c.b16 %v680, %v676
    %v897 = vpack.c.b16 %v681, %v677
    %v898 = vpack.c.b16 %v686, %v682
    %v899 = vpack.c.b16 %v687, %v683
    %v900 = vpack.c.b16 %v688, %v684
    %v901 = vpack.c.b16 %v689, %v685
    %v902 = vpack.c.b16 %v694, %v690
    %v903 = vpack.c.b16 %v695, %v691
    %v904 = vpack.c.b16 %v696, %v692
    %v905 = vpack.c.b16 %v697, %v693
    %v906 = vpack.c.b16 %v702, %v698
    %v907 = vpack.c.b16 %v703, %v699
    %v908 = vpack.c.b16 %v704, %v700
    %v909 = vpack.c.b16 %v705, %v701
    %v910 = vpack.c.b16 %v710, %v706
    %v911 = vpack.c.b16 %v711, %v707
    %v912 = vpack.c.b16 %v712, %v708
    %v913 = vpack.c.b16 %v713, %v709
    %v914 = vpack.c.b16 %v718, %v714
    %v915 = vpack.c.b16 %v719, %v715
    %v916 = vpack.c.b16 %v720, %v716
    %v917 = vpack.c.b16 %v721, %v717
    %v918 = vpack.c.b16 %v726, %v722
    %v919 = vpack.c.b16 %v727, %v723
    %v920 = vpack.c.b16 %v728, %v724
    %v921 = vpack.c.b16 %v729, %v725
    %v922 = vpack.c.b16 %v734, %v730
    %v923 = vpack.c.b16 %v735, %v731
    %v924 = vpack.c.b16 %v736, %v732
    %v925 = vpack.c.b16 %v737, %v733
    %v926 = vpack.c.b16 %v742, %v738
    %v927 = vpack.c.b16 %v743, %v739
    %v928 = vpack.c.b16 %v744, %v740
    %v929 = vpack.c.b16 %v745, %v741
    %v930 = vpack.c.b16 %v750, %v746
    %v931 = vpack.c.b16 %v751, %v747
    %v932 = vpack.c.b16 %v752, %v748
    %v933 = vpack.c.b16 %v753, %v749
    %v934 = vpack.c.b16 %v758, %v754
    %v935 = vpack.c.b16 %v759, %v755
    %v936 = vpack.c.b16 %v760, %v756
    %v937 = vpack.c.b16 %v761, %v757
    %v938 = vpack.c.b16 %v766, %v762
    %v939 = vpack.c.b16 %v767, %v763
    %v940 = vpack.c.b16 %v768, %v764
    %v941 = vpack.c.b16 %v769, %v765
    %v942 = vpack.c.b16 %v774, %v770
    %v943 = vpack.c.b16 %v775, %v771
    %v944 = vpack.c.b16 %v776, %v772
    %v945 = vpack.c.b16 %v777, %v773
    %v946 = vpack.c.b16 %v782, %v778
    %v947 = vpack.c.b16 %v783, %v779
    %v948 = vpack.c.b16 %v784, %v780
    %v949 = vpack.c.b16 %v785, %v781
    %v950 = vpack.c.b16 %v790, %v786
    %v951 = vpack.c.b16 %v791, %v787
    %v952 = vpack.c.b16 %v792, %v788
    %v953 = vpack.c.b16 %v793, %v789
    %v954 = vpack.c.b16 %v798, %v794
    %v955 = vpack.c.b16 %v799, %v795
    %v956 = vpack.c.b16 %v800, %v796
    %v957 = vpack.c.b16 %v801, %v797
    %v958 = vpack.c.b16 %v806, %v802
    %v959 = vpack.c.b16 %v807, %v803
    %v960 = vpack.c.b16 %v808, %v804
    %v961 = vpack.c.b16 %v809, %v805
    %v962 = vpack.c.b16 %v814, %v810
    %v963 = vpack.c.b16 %v815, %v811
    %v964 = vpack.c.b16 %v816, %v812
    %v965 = vpack.c.b16 %v817, %v813
    %v966 = vpack.c.b16 %v822, %v818
    %v967 = vpack.c.b16 %v823, %v819
    %v968 = vpack.c.b16 %v824, %v820
    %v969 = vpack.c.b16 %v825, %v821
    %v970 = vpack.c.b16 %v830, %v826
    %v971 = vpack.c.b16 %v831, %v827
    %v972 = vpack.c.b16 %v832, %v828
    %v973 = vpack.c.b16 %v833, %v829
    %v974 = vpack.c.b16 %v838, %v834
    %v975 = vpack.c.b16 %v839, %v835
    %v976 = vpack.c.b16 %v840, %v836
    %v977 = vpack.c.b16 %v841, %v837
    %v978 = vpack.c.b16 %v846, %v842
    %v979 = vpack.c.b16 %v847, %v843
    %v980 = vpack.c.b16 %v848, %v844
    %v981 = vpack.c.b16 %v849, %v845
    %v982 = vpack.c.b16 %v854, %v850
    %v983 = vpack.c.b16 %v855, %v851
    %v984 = vpack.c.b16 %v856, %v852
    %v985 = vpack.c.b16 %v857, %v853
    %1114 = vmatprep.subr.bf16.mxu0 %v859
    %1115 = vmatpush1.bf16.msra.mxu0 %v858
    %1116 = vmatprep.subr.bf16.mxu0 %v863
    %1117 = vmatpush1.bf16.msra.mxu0 %v862
    %1118 = vmatprep.subr.bf16.mxu0 %v867
    %1119 = vmatpush1.bf16.msra.mxu0 %v866
    %1120 = vmatprep.subr.bf16.mxu0 %v871
    %1121 = vmatpush1.bf16.msra.mxu0 %v870
    %1122 = vmatprep.subr.bf16.mxu0 %v875
    %1123 = vmatpush1.bf16.msra.mxu0 %v874
    %1124 = vmatprep.subr.bf16.mxu0 %v879
    %1125 = vmatpush1.bf16.msra.mxu0 %v878
    %1126 = vmatprep.subr.bf16.mxu0 %v883
    %1127 = vmatpush1.bf16.msra.mxu0 %v882
    %1128 = vmatprep.subr.bf16.mxu0 %v887
    %1129 = vmatpush1.bf16.msra.mxu0 %v886
    %1130 = vmatprep.subr.bf16.mxu0 %v891
    %1131 = vmatpush1.bf16.msra.mxu0 %v890
    %1132 = vmatprep.subr.bf16.mxu0 %v895
    %1133 = vmatpush1.bf16.msra.mxu0 %v894
    %1134 = vmatprep.subr.bf16.mxu0 %v899
    %1135 = vmatpush1.bf16.msra.mxu0 %v898
    %1136 = vmatprep.subr.bf16.mxu0 %v903
    %1137 = vmatpush1.bf16.msra.mxu0 %v902
    %1138 = vmatprep.subr.bf16.mxu0 %v907
    %1139 = vmatpush1.bf16.msra.mxu0 %v906
    %1140 = vmatprep.subr.bf16.mxu0 %v911
    %1141 = vmatpush1.bf16.msra.mxu0 %v910
    %1142 = vmatprep.subr.bf16.mxu0 %v915
    %1143 = vmatpush1.bf16.msra.mxu0 %v914
    %1144 = vmatprep.subr.bf16.mxu0 %v919
    %1145 = vmatpush1.bf16.msra.mxu0 %v918
    %1146 = vmatprep.mubr.bf16.mxu0 %v321
    %1147 = vmatmul.mubr.bf16.gmra.mrb[0].mxu0 %v320
    %v1148 = vpop.f32.mrb[0].mxu0
    %v1149 = vadd.f32 %v457, %v1148
    %v1150 = vpop.f32.mrb[0].mxu0
    %v1151 = vadd.f32 %v461, %v1150
    %v1152 = vpop.f32.mrb[0].mxu0
    %v1153 = vpop.f32.mrb[0].mxu0
    %1154 = vdwg.mxu0
    %1155 = vmatprep.subr.bf16.mxu0 %v923
    %1156 = vmatpush1.bf16.msra.mxu0 %v922
    %1157 = vmatprep.subr.bf16.mxu0 %v927
    %1158 = vmatpush1.bf16.msra.mxu0 %v926
    %1159 = vmatprep.subr.bf16.mxu0 %v931
    %1160 = vmatpush1.bf16.msra.mxu0 %v930
    %1161 = vmatprep.subr.bf16.mxu0 %v935
    %1162 = vmatpush1.bf16.msra.mxu0 %v934
    %1163 = vmatprep.subr.bf16.mxu0 %v939
    %1164 = vmatpush1.bf16.msra.mxu0 %v938
    %1165 = vmatprep.subr.bf16.mxu0 %v943
    %1166 = vmatpush1.bf16.msra.mxu0 %v942
    %1167 = vmatprep.subr.bf16.mxu0 %v947
    %1168 = vmatpush1.bf16.msra.mxu0 %v946
    %1169 = vmatprep.subr.bf16.mxu0 %v951
    %1170 = vmatpush1.bf16.msra.mxu0 %v950
    %1171 = vmatprep.subr.bf16.mxu0 %v955
    %1172 = vmatpush1.bf16.msra.mxu0 %v954
    %1173 = vmatprep.subr.bf16.mxu0 %v959
    %1174 = vmatpush1.bf16.msra.mxu0 %v958
    %1175 = vmatprep.subr.bf16.mxu0 %v963
    %1176 = vmatpush1.bf16.msra.mxu0 %v962
    %1177 = vmatprep.subr.bf16.mxu0 %v967
    %1178 = vmatpush1.bf16.msra.mxu0 %v966
    %1179 = vmatprep.subr.bf16.mxu0 %v971
    %1180 = vmatpush1.bf16.msra.mxu0 %v970
    %1181 = vmatprep.subr.bf16.mxu0 %v975
    %1182 = vmatpush1.bf16.msra.mxu0 %v974
    %1183 = vmatprep.subr.bf16.mxu0 %v979
    %1184 = vmatpush1.bf16.msra.mxu0 %v978
    %1185 = vmatprep.subr.bf16.mxu0 %v983
    %1186 = vmatpush1.bf16.msra.mxu0 %v982
    %1187 = vmatprep.mubr.bf16.mxu0 %v323
    %1188 = vmatmul.mubr.bf16.gmra.mrb[0].mxu0 %v322
    %v1189 = vpop.f32.mrb[0].mxu0
    %v1190 = vadd.f32 %v1149, %v1189
    %v1191 = vpop.f32.mrb[0].mxu0
    %v1192 = vadd.f32 %v1151, %v1191
    %v1193 = vpop.f32.mrb[0].mxu0
    %v1194 = vpop.f32.mrb[0].mxu0
    %1195 = vdwg.mxu0
    %1196 = vmatprep.subr.bf16.mxu0 %v861
    %1197 = vmatpush1.bf16.msra.mxu0 %v860
    %1198 = vmatprep.subr.bf16.mxu0 %v865
    %1199 = vmatpush1.bf16.msra.mxu0 %v864
    %1200 = vmatprep.subr.bf16.mxu0 %v869
    %1201 = vmatpush1.bf16.msra.mxu0 %v868
    %1202 = vmatprep.subr.bf16.mxu0 %v873
    %1203 = vmatpush1.bf16.msra.mxu0 %v872
    %1204 = vmatprep.subr.bf16.mxu0 %v877
    %1205 = vmatpush1.bf16.msra.mxu0 %v876
    %1206 = vmatprep.subr.bf16.mxu0 %v881
    %1207 = vmatpush1.bf16.msra.mxu0 %v880
    %1208 = vmatprep.subr.bf16.mxu0 %v885
    %1209 = vmatpush1.bf16.msra.mxu0 %v884
    %1210 = vmatprep.subr.bf16.mxu0 %v889
    %1211 = vmatpush1.bf16.msra.mxu0 %v888
    %1212 = vmatprep.subr.bf16.mxu0 %v893
    %1213 = vmatpush1.bf16.msra.mxu0 %v892
    %1214 = vmatprep.subr.bf16.mxu0 %v897
    %1215 = vmatpush1.bf16.msra.mxu0 %v896
    %1216 = vmatprep.subr.bf16.mxu0 %v901
    %1217 = vmatpush1.bf16.msra.mxu0 %v900
    %1218 = vmatprep.subr.bf16.mxu0 %v905
    %1219 = vmatpush1.bf16.msra.mxu0 %v904
    %1220 = vmatprep.subr.bf16.mxu0 %v909
    %1221 = vmatpush1.bf16.msra.mxu0 %v908
    %1222 = vmatprep.subr.bf16.mxu0 %v913
    %1223 = vmatpush1.bf16.msra.mxu0 %v912
    %1224 = vmatprep.subr.bf16.mxu0 %v917
    %1225 = vmatpush1.bf16.msra.mxu0 %v916
    %1226 = vmatprep.subr.bf16.mxu0 %v921
    %1227 = vmatpush1.bf16.msra.mxu0 %v920
    %1228 = vmatprep.mubr.bf16.mxu0 %v321
    %1229 = vmatmul.mubr.bf16.gmra.mrb[0].mxu0 %v320
    %v1230 = vpop.f32.mrb[0].mxu0
    %v1231 = vadd.f32 %v465, %v1230
    %v1232 = vpop.f32.mrb[0].mxu0
    %v1233 = vadd.f32 %v469, %v1232
    %v1234 = vpop.f32.mrb[0].mxu0
    %v1235 = vpop.f32.mrb[0].mxu0
    %1236 = vdwg.mxu0
    %1237 = vmatprep.subr.bf16.mxu0 %v925
    %1238 = vmatpush1.bf16.msra.mxu0 %v924
    %1239 = vmatprep.subr.bf16.mxu0 %v929
    %1240 = vmatpush1.bf16.msra.mxu0 %v928
    %1241 = vmatprep.subr.bf16.mxu0 %v933
    %1242 = vmatpush1.bf16.msra.mxu0 %v932
    %1243 = vmatprep.subr.bf16.mxu0 %v937
    %1244 = vmatpush1.bf16.msra.mxu0 %v936
    %1245 = vmatprep.subr.bf16.mxu0 %v941
    %1246 = vmatpush1.bf16.msra.mxu0 %v940
    %1247 = vmatprep.subr.bf16.mxu0 %v945
    %1248 = vmatpush1.bf16.msra.mxu0 %v944
    %1249 = vmatprep.subr.bf16.mxu0 %v949
    %1250 = vmatpush1.bf16.msra.mxu0 %v948
    %1251 = vmatprep.subr.bf16.mxu0 %v953
    %1252 = vmatpush1.bf16.msra.mxu0 %v952
    %1253 = vmatprep.subr.bf16.mxu0 %v957
    %1254 = vmatpush1.bf16.msra.mxu0 %v956
    %1255 = vmatprep.subr.bf16.mxu0 %v961
    %1256 = vmatpush1.bf16.msra.mxu0 %v960
    %1257 = vmatprep.subr.bf16.mxu0 %v965
    %1258 = vmatpush1.bf16.msra.mxu0 %v964
    %1259 = vmatprep.subr.bf16.mxu0 %v969
    %1260 = vmatpush1.bf16.msra.mxu0 %v968
    %1261 = vmatprep.subr.bf16.mxu0 %v973
    %1262 = vmatpush1.bf16.msra.mxu0 %v972
    %1263 = vmatprep.subr.bf16.mxu0 %v977
    %1264 = vmatpush1.bf16.msra.mxu0 %v976
    %1265 = vmatprep.subr.bf16.mxu0 %v981
    %1266 = vmatpush1.bf16.msra.mxu0 %v980
    %1267 = vmatprep.subr.bf16.mxu0 %v985
    %1268 = vmatpush1.bf16.msra.mxu0 %v984
    %1269 = vmatprep.mubr.bf16.mxu0 %v323
    %1270 = vmatmul.mubr.bf16.gmra.mrb[0].mxu0 %v322
    %v1271 = vpop.f32.mrb[0].mxu0
    %v1272 = vadd.f32 %v1231, %v1271
    %v1273 = vpop.f32.mrb[0].mxu0
    %v1274 = vadd.f32 %v1233, %v1273
    %v1275 = vpop.f32.mrb[0].mxu0
    %v1276 = vpop.f32.mrb[0].mxu0
    %1277 = vdwg.mxu0
    %v1278 = vmax.f32 %v1190, 0.0
    %v1279 = vmax.f32 %v1192, 0.0
    %v1280 = vmax.f32 %v1272, 0.0
    %v1281 = vmax.f32 %v1274, 0.0
    %v1282 = vpack.c.bf16 %v1278, %v1278
    %v1283 = vpack.c.bf16 %v1279, %v1279
    %v1284 = vpack.c.bf16 %v1280, %v1280
    %v1285 = vpack.c.bf16 %v1281, %v1281
    %v1286 = vld [vmem:[#allocation7] sm:$0xf]
    %v1287 = vld [vmem:[#allocation7 + $0x4] sm:$0xf]
    %v1288 = vld [vmem:[#allocation7 + $0x8] sm:$0xf]
    %v1289 = vld [vmem:[#allocation7 + $0xc] sm:$0xf]
    %v1290 = vld [vmem:[#allocation7 + $0x10] sm:$0xf]
    %v1291 = vld [vmem:[#allocation7 + $0x14] sm:$0xf]
    %v1292 = vld [vmem:[#allocation7 + $0x18] sm:$0xf]
    %v1293 = vld [vmem:[#allocation7 + $0x1c] sm:$0xf]
    %v1294 = vld [vmem:[#allocation7 + $0x20] sm:$0xf]
    %v1295 = vld [vmem:[#allocation7 + $0x24] sm:$0xf]
    %v1296 = vld [vmem:[#allocation7 + $0x28] sm:$0xf]
    %v1297 = vld [vmem:[#allocation7 + $0x2c] sm:$0xf]
    %v1298 = vld [vmem:[#allocation7 + $0x30] sm:$0xf]
    %v1299 = vld [vmem:[#allocation7 + $0x34] sm:$0xf]
    %v1300 = vld [vmem:[#allocation7 + $0x38] sm:$0xf]
    %v1301 = vld [vmem:[#allocation7 + $0x3c] sm:$0xf]
    %v1302 = vld [vmem:[#allocation7 + $0x40] sm:$0xf]
    %v1303 = vld [vmem:[#allocation7 + $0x44] sm:$0xf]
    %v1304 = vld [vmem:[#allocation7 + $0x48] sm:$0xf]
    %v1305 = vld [vmem:[#allocation7 + $0x4c] sm:$0xf]
    %v1306 = vld [vmem:[#allocation7 + $0x50] sm:$0xf]
    %v1307 = vld [vmem:[#allocation7 + $0x54] sm:$0xf]
    %v1308 = vld [vmem:[#allocation7 + $0x58] sm:$0xf]
    %v1309 = vld [vmem:[#allocation7 + $0x5c] sm:$0xf]
    %v1310 = vld [vmem:[#allocation7 + $0x60] sm:$0xf]
    %v1311 = vld [vmem:[#allocation7 + $0x64] sm:$0xf]
    %v1312 = vld [vmem:[#allocation7 + $0x68] sm:$0xf]
    %v1313 = vld [vmem:[#allocation7 + $0x6c] sm:$0xf]
    %v1314 = vld [vmem:[#allocation7 + $0x70] sm:$0xf]
    %v1315 = vld [vmem:[#allocation7 + $0x74] sm:$0xf]
    %v1316 = vld [vmem:[#allocation7 + $0x78] sm:$0xf]
    %v1317 = vld [vmem:[#allocation7 + $0x7c] sm:$0xf]
    %v1318 = vld [vmem:[#allocation7 + $0x80] sm:$0xf]
    %v1319 = vld [vmem:[#allocation7 + $0x84] sm:$0xf]
    %v1320 = vld [vmem:[#allocation7 + $0x88] sm:$0xf]
    %v1321 = vld [vmem:[#allocation7 + $0x8c] sm:$0xf]
    %v1322 = vld [vmem:[#allocation7 + $0x90] sm:$0xf]
    %v1323 = vld [vmem:[#allocation7 + $0x94] sm:$0xf]
    %v1324 = vld [vmem:[#allocation7 + $0x98] sm:$0xf]
    %v1325 = vld [vmem:[#allocation7 + $0x9c] sm:$0xf]
    %v1326 = vld [vmem:[#allocation7 + $0xa0] sm:$0xf]
    %v1327 = vld [vmem:[#allocation7 + $0xa4] sm:$0xf]
    %v1328 = vld [vmem:[#allocation7 + $0xa8] sm:$0xf]
    %v1329 = vld [vmem:[#allocation7 + $0xac] sm:$0xf]
    %v1330 = vld [vmem:[#allocation7 + $0xb0] sm:$0xf]
    %v1331 = vld [vmem:[#allocation7 + $0xb4] sm:$0xf]
    %v1332 = vld [vmem:[#allocation7 + $0xb8] sm:$0xf]
    %v1333 = vld [vmem:[#allocation7 + $0xbc] sm:$0xf]
    %v1334 = vld [vmem:[#allocation7 + $0xc0] sm:$0xf]
    %v1335 = vld [vmem:[#allocation7 + $0xc4] sm:$0xf]
    %v1336 = vld [vmem:[#allocation7 + $0xc8] sm:$0xf]
    %v1337 = vld [vmem:[#allocation7 + $0xcc] sm:$0xf]
    %v1338 = vld [vmem:[#allocation7 + $0xd0] sm:$0xf]
    %v1339 = vld [vmem:[#allocation7 + $0xd4] sm:$0xf]
    %v1340 = vld [vmem:[#allocation7 + $0xd8] sm:$0xf]
    %v1341 = vld [vmem:[#allocation7 + $0xdc] sm:$0xf]
    %v1342 = vld [vmem:[#allocation7 + $0xe0] sm:$0xf]
    %v1343 = vld [vmem:[#allocation7 + $0xe4] sm:$0xf]
    %v1344 = vld [vmem:[#allocation7 + $0xe8] sm:$0xf]
    %v1345 = vld [vmem:[#allocation7 + $0xec] sm:$0xf]
    %v1346 = vld [vmem:[#allocation7 + $0xf0] sm:$0xf]
    %v1347 = vld [vmem:[#allocation7 + $0xf4] sm:$0xf]
    %v1348 = vld [vmem:[#allocation7 + $0xf8] sm:$0xf]
    %v1349 = vld [vmem:[#allocation7 + $0xfc] sm:$0xf]
    %v1350 = vld [vmem:[%s7] sm:$0x1]
    %v1352 = vlaneseq
    %v1353 = vshrl.u32 %v1352, 7
    %v1354 = vsub.s32 0, %v1353
    %v1355 = vrot.slane %v1350, %v1354
    %v1421 = vunpack.c.l.b16 %v1286
    %v1422 = vunpack.c.l.b16 %v1287
    %v1423 = vunpack.c.l.b16 %v1288
    %v1424 = vunpack.c.l.b16 %v1289
    %v1425 = vunpack.c.l.b16 %v1290
    %v1426 = vunpack.c.l.b16 %v1291
    %v1427 = vunpack.c.l.b16 %v1292
    %v1428 = vunpack.c.l.b16 %v1293
    %v1429 = vunpack.c.l.b16 %v1294
    %v1430 = vunpack.c.l.b16 %v1295
    %v1431 = vunpack.c.l.b16 %v1296
    %v1432 = vunpack.c.l.b16 %v1297
    %v1433 = vunpack.c.l.b16 %v1298
    %v1434 = vunpack.c.l.b16 %v1299
    %v1435 = vunpack.c.l.b16 %v1300
    %v1436 = vunpack.c.l.b16 %v1301
    %v1437 = vunpack.c.l.b16 %v1302
    %v1438 = vunpack.c.l.b16 %v1303
    %v1439 = vunpack.c.l.b16 %v1304
    %v1440 = vunpack.c.l.b16 %v1305
    %v1441 = vunpack.c.l.b16 %v1306
    %v1442 = vunpack.c.l.b16 %v1307
    %v1443 = vunpack.c.l.b16 %v1308
    %v1444 = vunpack.c.l.b16 %v1309
    %v1445 = vunpack.c.l.b16 %v1310
    %v1446 = vunpack.c.l.b16 %v1311
    %v1447 = vunpack.c.l.b16 %v1312
    %v1448 = vunpack.c.l.b16 %v1313
    %v1449 = vunpack.c.l.b16 %v1314
    %v1450 = vunpack.c.l.b16 %v1315
    %v1451 = vunpack.c.l.b16 %v1316
    %v1452 = vunpack.c.l.b16 %v1317
    %v1453 = vunpack.c.l.b16 %v1318
    %v1454 = vunpack.c.l.b16 %v1319
    %v1455 = vunpack.c.l.b16 %v1320
    %v1456 = vunpack.c.l.b16 %v1321
    %v1457 = vunpack.c.l.b16 %v1322
    %v1458 = vunpack.c.l.b16 %v1323
    %v1459 = vunpack.c.l.b16 %v1324
    %v1460 = vunpack.c.l.b16 %v1325
    %v1461 = vunpack.c.l.b16 %v1326
    %v1462 = vunpack.c.l.b16 %v1327
    %v1463 = vunpack.c.l.b16 %v1328
    %v1464 = vunpack.c.l.b16 %v1329
    %v1465 = vunpack.c.l.b16 %v1330
    %v1466 = vunpack.c.l.b16 %v1331
    %v1467 = vunpack.c.l.b16 %v1332
    %v1468 = vunpack.c.l.b16 %v1333
    %v1469 = vunpack.c.l.b16 %v1334
    %v1470 = vunpack.c.l.b16 %v1335
    %v1471 = vunpack.c.l.b16 %v1336
    %v1472 = vunpack.c.l.b16 %v1337
    %v1473 = vunpack.c.l.b16 %v1338
    %v1474 = vunpack.c.l.b16 %v1339
    %v1475 = vunpack.c.l.b16 %v1340
    %v1476 = vunpack.c.l.b16 %v1341
    %v1477 = vunpack.c.l.b16 %v1342
    %v1478 = vunpack.c.l.b16 %v1343
    %v1479 = vunpack.c.l.b16 %v1344
    %v1480 = vunpack.c.l.b16 %v1345
    %v1481 = vunpack.c.l.b16 %v1346
    %v1482 = vunpack.c.l.b16 %v1347
    %v1483 = vunpack.c.l.b16 %v1348
    %v1484 = vunpack.c.l.b16 %v1349
    %v1485 = vpack.c.b16 %v1422, %v1421
    %v1486 = vpack.c.b16 %v1424, %v1423
    %v1487 = vpack.c.b16 %v1426, %v1425
    %v1488 = vpack.c.b16 %v1428, %v1427
    %v1489 = vpack.c.b16 %v1430, %v1429
    %v1490 = vpack.c.b16 %v1432, %v1431
    %v1491 = vpack.c.b16 %v1434, %v1433
    %v1492 = vpack.c.b16 %v1436, %v1435
    %v1493 = vpack.c.b16 %v1438, %v1437
    %v1494 = vpack.c.b16 %v1440, %v1439
    %v1495 = vpack.c.b16 %v1442, %v1441
    %v1496 = vpack.c.b16 %v1444, %v1443
    %v1497 = vpack.c.b16 %v1446, %v1445
    %v1498 = vpack.c.b16 %v1448, %v1447
    %v1499 = vpack.c.b16 %v1450, %v1449
    %v1500 = vpack.c.b16 %v1452, %v1451
    %v1501 = vpack.c.b16 %v1454, %v1453
    %v1502 = vpack.c.b16 %v1456, %v1455
    %v1503 = vpack.c.b16 %v1458, %v1457
    %v1504 = vpack.c.b16 %v1460, %v1459
    %v1505 = vpack.c.b16 %v1462, %v1461
    %v1506 = vpack.c.b16 %v1464, %v1463
    %v1507 = vpack.c.b16 %v1466, %v1465
    %v1508 = vpack.c.b16 %v1468, %v1467
    %v1509 = vpack.c.b16 %v1470, %v1469
    %v1510 = vpack.c.b16 %v1472, %v1471
    %v1511 = vpack.c.b16 %v1474, %v1473
    %v1512 = vpack.c.b16 %v1476, %v1475
    %v1513 = vpack.c.b16 %v1478, %v1477
    %v1514 = vpack.c.b16 %v1480, %v1479
    %v1515 = vpack.c.b16 %v1482, %v1481
    %v1516 = vpack.c.b16 %v1484, %v1483
    %1549 = vmatprep.subr.bf16.mxu0 0
    %1550 = vmatpush1.bf16.msra.mxu0 %v1485
    %1551 = vmatprep.subr.bf16.mxu0 0
    %1552 = vmatpush1.bf16.msra.mxu0 %v1486
    %1553 = vmatprep.subr.bf16.mxu0 0
    %1554 = vmatpush1.bf16.msra.mxu0 %v1487
    %1555 = vmatprep.subr.bf16.mxu0 0
    %1556 = vmatpush1.bf16.msra.mxu0 %v1488
    %1557 = vmatprep.subr.bf16.mxu0 0
    %1558 = vmatpush1.bf16.msra.mxu0 %v1489
    %1559 = vmatprep.subr.bf16.mxu0 0
    %1560 = vmatpush1.bf16.msra.mxu0 %v1490
    %1561 = vmatprep.subr.bf16.mxu0 0
    %1562 = vmatpush1.bf16.msra.mxu0 %v1491
    %1563 = vmatprep.subr.bf16.mxu0 0
    %1564 = vmatpush1.bf16.msra.mxu0 %v1492
    %1565 = vmatprep.subr.bf16.mxu0 0
    %1566 = vmatpush1.bf16.msra.mxu0 %v1493
    %1567 = vmatprep.subr.bf16.mxu0 0
    %1568 = vmatpush1.bf16.msra.mxu0 %v1494
    %1569 = vmatprep.subr.bf16.mxu0 0
    %1570 = vmatpush1.bf16.msra.mxu0 %v1495
    %1571 = vmatprep.subr.bf16.mxu0 0
    %1572 = vmatpush1.bf16.msra.mxu0 %v1496
    %1573 = vmatprep.subr.bf16.mxu0 0
    %1574 = vmatpush1.bf16.msra.mxu0 %v1497
    %1575 = vmatprep.subr.bf16.mxu0 0
    %1576 = vmatpush1.bf16.msra.mxu0 %v1498
    %1577 = vmatprep.subr.bf16.mxu0 0
    %1578 = vmatpush1.bf16.msra.mxu0 %v1499
    %1579 = vmatprep.subr.bf16.mxu0 0
    %1580 = vmatpush1.bf16.msra.mxu0 %v1500
    %1581 = vmatprep.mubr.bf16.mxu0 %v1283
    %1582 = vmatmul.mubr.bf16.gmra.mrb[0].mxu0 %v1282
    %v1583 = vpop.f32.mrb[0].mxu0
    %v1584 = vadd.f32 %v1355, %v1583
    %v1585 = vpop.f32.mrb[0].mxu0
    %v1586 = vpop.f32.mrb[0].mxu0
    %v1587 = vpop.f32.mrb[0].mxu0
    %1588 = vdwg.mxu0
    %1589 = vmatprep.subr.bf16.mxu0 0
    %1590 = vmatpush1.bf16.msra.mxu0 %v1501
    %1591 = vmatprep.subr.bf16.mxu0 0
    %1592 = vmatpush1.bf16.msra.mxu0 %v1502
    %1593 = vmatprep.subr.bf16.mxu0 0
    %1594 = vmatpush1.bf16.msra.mxu0 %v1503
    %1595 = vmatprep.subr.bf16.mxu0 0
    %1596 = vmatpush1.bf16.msra.mxu0 %v1504
    %1597 = vmatprep.subr.bf16.mxu0 0
    %1598 = vmatpush1.bf16.msra.mxu0 %v1505
    %1599 = vmatprep.subr.bf16.mxu0 0
    %1600 = vmatpush1.bf16.msra.mxu0 %v1506
    %1601 = vmatprep.subr.bf16.mxu0 0
    %1602 = vmatpush1.bf16.msra.mxu0 %v1507
    %1603 = vmatprep.subr.bf16.mxu0 0
    %1604 = vmatpush1.bf16.msra.mxu0 %v1508
    %1605 = vmatprep.subr.bf16.mxu0 0
    %1606 = vmatpush1.bf16.msra.mxu0 %v1509
    %1607 = vmatprep.subr.bf16.mxu0 0
    %1608 = vmatpush1.bf16.msra.mxu0 %v1510
    %1609 = vmatprep.subr.bf16.mxu0 0
    %1610 = vmatpush1.bf16.msra.mxu0 %v1511
    %1611 = vmatprep.subr.bf16.mxu0 0
    %1612 = vmatpush1.bf16.msra.mxu0 %v1512
    %1613 = vmatprep.subr.bf16.mxu0 0
    %1614 = vmatpush1.bf16.msra.mxu0 %v1513
    %1615 = vmatprep.subr.bf16.mxu0 0
    %1616 = vmatpush1.bf16.msra.mxu0 %v1514
    %1617 = vmatprep.subr.bf16.mxu0 0
    %1618 = vmatpush1.bf16.msra.mxu0 %v1515
    %1619 = vmatprep.subr.bf16.mxu0 0
    %1620 = vmatpush1.bf16.msra.mxu0 %v1516
    %1621 = vmatprep.mubr.bf16.mxu0 %v1285
    %1622 = vmatmul.mubr.bf16.gmra.mrb[0].mxu0 %v1284
    %v1623 = vpop.f32.mrb[0].mxu0
    %v1624 = vadd.f32 %v1584, %v1623
    %v1625 = vpop.f32.mrb[0].mxu0
    %v1626 = vpop.f32.mrb[0].mxu0
    %v1627 = vpop.f32.mrb[0].mxu0
    %1628 = vdwg.mxu0
    %v1629 = vlaneseq
    %v1630 = vand.u32 %v1629, 127
    %vm1631 = vcmp.lt.s32.totalorder %v1630, 3
    %v1632 = vsel %vm1631, %v1624, -1e+30
    %vm1633 = vcmask 1041408
    %v1634 = vsel %vm1633, %v1632, -inf
    %1635 = vmax.xlane.f32.xlu0 %v1634
    %v1636 = vpop.xlane.xlu0 %1635
    %v1637 = vsub.f32 %v1632, %v1636
    %v1638 = vmul.f32 %v1637, 1.442695
    %v1639 = vpow.pop %v1638
    %v1640 = vsel %vm1633, %v1639, 0.0
    %1641 = vadd.xlane.f32.xlu0 %v1640
    %v1642 = vpop.xlane.xlu0 %1641
    %v1643 = vrcp.pop %v1642
    %v1644 = vmul.f32 %v1639, %v1643
    %vm1645 = vcmask 17408
    %1646 = vst.msk [vmem:[#allocation8] sm:$0x3] %vm1645, %v1644
    // Predicated region
    $region46: #{snli_forward.1} parent=1 // pred_check
      _
    $region47: #{snli_forward.1} parent=1 // pred_check_branch
      %1648 = sbr.rel (0) target = $region49
    $region48: #{snli_forward.1} parent=1 // pred_region
      %s1650 = ssub.s32 32, 32
      %1651 = vsyncadd [#allocation4], %s1650
      %s1653 = sshll.u32 [#allocation8], 4
      %s1654 = int_to_ptr.vmem [resolvable:$true] %s1653
      %1656 = dma.vmem_to_hbm [thread:$0]  %s1654, 32, %s8, [#allocation4]
    $region49: #{snli_forward.1} parent=1 // pred_fallthru
      _
    // Predicated region
    $region50: #{snli_forward.1} parent=1 // pred_check
      _
    $region51: #{snli_forward.1} parent=1 // pred_check_branch
      %1658 = sbr.rel (0) target = $region53
    $region52: #{snli_forward.1} parent=1 // pred_region
      %1659 = dma.done [#allocation4], 32
    $region53: #{snli_forward.1} parent=1 // pred_fallthru
      _
    %1660 = vsyncpa [#allocation3], 1
    %1661 = vsyncpa [#allocation6], 1
    %1662 = vsyncpa [#allocation4], 1

</llo_original>
